<compile_context>
chip_gen: v5e
topology: v5e:2x2
jax: 0.10.0
libtpu: 0.0.40
codegen_flags: <defaults>
</compile_context>

<pallas_src>
import functools

import numpy as np
import jax
import jax.numpy as jnp
from jax.experimental import pallas as pl
from jax.experimental.pallas import tpu as pltpu


def _round_up(x, m):
    return ((x + m - 1) // m) * m


def _kan_kernel(x_ref, w_ref, o_ref, feats_ref, *, knots, k, n_feat, dp, mxu_dtype):
    """One (out-tile, batch-tile) grid step.

    x_ref:     [dp, tb]  f32        -- x^T tile (batch on lanes)
    w_ref:     [tn, F]   mxu_dtype  -- F = n_feat*dp, column index = j*dp + d
    o_ref:     [tn, tb]  f32        -- out^T tile (lane-dense store)
    feats_ref: [F,  tb]  f32        -- VMEM feature slab (matmul RHS)
    """
    x = x_ref[...].astype(jnp.float32)
    nt = len(knots)                                   # == G + 2k - 1

    # Order-1 (piecewise constant) bases, unrolled at trace time.
    # TODO(synk): PyTorch's `_evaluate` body is not provided; standard Cox-de
    # Boor (order k, half-open intervals, 0/0 -> 0) is assumed (shapes match).
    B = [((x >= knots[j]) & (x < knots[j + 1])).astype(jnp.float32)
         for j in range(nt - 1)]

    if k == 1:
        for j in range(nt - 1):
            feats_ref[j * dp:(j + 1) * dp, :] = B[j]
    else:
        # Cox-de Boor recursion up to order k; denominators are static python
        # floats, so 0/0 -> 0 is resolved at trace time (no runtime divides).
        for m in range(2, k + 1):
            last = (m == k)
            newB = []
            for j in range(nt - m):
                d1 = knots[j + m - 1] - knots[j]
                d2 = knots[j + m] - knots[j + 1]
                term = jnp.zeros_like(x)
                if d1 != 0.0:
                    term = term + (x - knots[j]) * (1.0 / d1) * B[j]
                if d2 != 0.0:
                    term = term + (knots[j + m] - x) * (1.0 / d2) * B[j + 1]
                if last:
                    # Finalized order-k basis goes straight to the VMEM slab
                    # (keeps vreg liveness bounded for large tiles).
                    feats_ref[j * dp:(j + 1) * dp, :] = term
                else:
                    newB.append(term)
            B = newB

    # silu(x) residual is the last feature (torch.cat([y1, act(x)], dim=2)).
    feats_ref[(n_feat - 1) * dp:n_feat * dp, :] = x * jax.nn.sigmoid(x)

    # Single fused MXU matmul: [tn, F] @ [F, tb] -> [tn, tb], f32 accumulation.
    feats = feats_ref[...].astype(mxu_dtype)
    o_ref[...] = jnp.dot(w_ref[...], feats,
                         preferred_element_type=jnp.float32).astype(o_ref.dtype)


def regular_kan_forward(x, w, knots, k, *, tb=256, tn=256,
                        mxu_dtype=jnp.bfloat16):
    """x: [batch, in_dim] f32; w: [(G+k)*in_dim, out_dim] f32 (torch layout)."""
    batch, in_dim = x.shape
    n_feat = w.shape[0] // in_dim                  # == G + k
    out_dim = w.shape[1]

    # ---- padded / tiled sizes ------------------------------------------------
    dp = _round_up(in_dim, 8)                             # sublane-aligned in_dim
    tb = _round_up(min(tb, _round_up(batch, 128)), 128)   # lane-dense batch tile
    bp = _round_up(batch, tb)
    tn = _round_up(min(tn, _round_up(out_dim, 8)), 8)     # out tile (sublanes)
    op = _round_up(out_dim, tn)
    F = n_feat * dp

    # ---- operands in the kernel's transposed layout (layout plumbing) -------
    # x^T zero-padded to [dp, bp]; padded dims hit zero weight rows, padded
    # batch columns are sliced off below.
    xt = jnp.zeros((dp, bp), jnp.float32).at[:in_dim, :batch].set(
        x.astype(jnp.float32).T)
    # W^T regrouped so column index = j*dp + d  (torch row index was d*n_feat+j)
    w3 = jnp.transpose(w.reshape(in_dim, n_feat, out_dim), (2, 1, 0))   # [o,j,d]
    wt = jnp.zeros((op, n_feat, dp), jnp.float32).at[:out_dim, :, :in_dim].set(w3)
    wt = wt.reshape(op, F).astype(mxu_dtype)

    grid = (op // tn, bp // tb)                    # (out tiles, batch tiles)

    kernel = functools.partial(
        _kan_kernel, knots=tuple(float(v) for v in knots), k=int(k),
        n_feat=n_feat, dp=dp, mxu_dtype=mxu_dtype)

    wbytes = int(np.dtype(mxu_dtype).itemsize)
    vmem_bytes = (2 * dp * tb * 4 + 2 * tn * F * wbytes
                  + 2 * tn * tb * 4 + F * tb * 4)
    cost = pl.CostEstimate(
        flops=2 * bp * F * op,
        transcendentals=bp * dp,
        bytes_accessed=int(xt.size * 4 + wt.size * wbytes + op * bp * 4))

    out_t = pl.pallas_call(
        kernel,
        out_shape=jax.ShapeDtypeStruct((op, bp), jnp.float32),
        grid=grid,
        in_specs=[
            pl.BlockSpec((dp, tb), lambda oi, bi: (0, bi)),
            # Weight tile depends only on the (outer) out-tile index, so it is
            # not re-DMAed across the inner batch steps.
            # TODO(synk): for production-sized weights, use pipeline_mode=
            # pl.Buffered(1) (or a one-shot copy from pl.ANY) to drop the 2x
            # double-buffer VMEM cost of this resident block on v7x.
            pl.BlockSpec((tn, F), lambda oi, bi: (oi, 0)),
        ],
        out_specs=pl.BlockSpec((tn, tb), lambda oi, bi: (oi, bi)),
        scratch_shapes=[pltpu.VMEM((F, tb), jnp.float32)],
        compiler_params=pltpu.CompilerParams(
            dimension_semantics=("parallel", "parallel"),
            vmem_limit_bytes=int(min(100 << 20, 2 * vmem_bytes + (8 << 20)))),
        cost_estimate=cost,
    )(xt, wt)

    # Back to the module's [batch, out_dim] layout.
    return out_t[:out_dim, :batch].T


def _reference(x, w, knots, k):
    """Pure-JAX mirror of Regular_KAN.forward (same Cox-de Boor convention)."""
    nt = len(knots)
    B = [((x >= knots[j]) & (x < knots[j + 1])).astype(jnp.float32)
         for j in range(nt - 1)]
    for m in range(2, k + 1):
        newB = []
        for j in range(nt - m):
            d1 = knots[j + m - 1] - knots[j]
            d2 = knots[j + m] - knots[j + 1]
            term = jnp.zeros_like(x)
            if d1 != 0.0:
                term = term + (x - knots[j]) * (1.0 / d1) * B[j]
            if d2 != 0.0:
                term = term + (knots[j + m] - x) * (1.0 / d2) * B[j + 1]
            newB.append(term)
        B = newB
    y1 = jnp.stack(B, axis=2)                                        # [b,D,G+k-1]
    y2 = jnp.concatenate([y1, jax.nn.silu(x)[:, :, None]], axis=2)   # [b,D,G+k]
    return jnp.matmul(y2.reshape(x.shape[0], -1), w,
                      precision=jax.lax.Precision.HIGHEST)


if __name__ == "__main__":
    # Module hyper-parameters (consistent with Regular_KAN.__init__)
    in_dim, out_dim, G, k = 4, 8, 8, 4
    t0, t1 = 0.0, 1.0
    batch = 1000   # deliberately NOT a multiple of the tile: exercises padding

    # knot vector: cat([full(k-1, t0), linspace(t0, t1, G+1), full(k-1, t1)])
    knots = np.concatenate([
        np.full(k - 1, t0), np.linspace(t0, t1, G + 1), np.full(k - 1, t1)])

    key = jax.random.PRNGKey(0)
    kx, kw = jax.random.split(key)
    x = jax.random.uniform(kx, (batch, in_dim), jnp.float32, minval=t0, maxval=t1)

    # xavier_normal_ on w [(G+k)*in_dim, out_dim]: std = sqrt(2/(fan_in+fan_out))
    fan_in, fan_out = (G + k) * in_dim, out_dim
    std = float(np.sqrt(2.0 / (fan_in + fan_out)))
    w = jax.random.normal(kw, ((G + k) * in_dim, out_dim), jnp.float32) * std

    ref = _reference(x, w, tuple(float(v) for v in knots), k)

    # Exact path (f32 MXU operands): tight parity check.
    out_f32 = jax.block_until_ready(
        regular_kan_forward(x, w, knots, k, tb=256, mxu_dtype=jnp.float32))
    assert out_f32.shape == (batch, out_dim)
    np.testing.assert_allclose(np.asarray(out_f32), np.asarray(ref),
                               rtol=1e-5, atol=1e-5)

    # Default perf path (bf16 MXU operands, f32 accumulate): loose parity check.
    out_bf16 = jax.block_until_ready(
        regular_kan_forward(x, w, knots, k, tb=256, mxu_dtype=jnp.bfloat16))
    np.testing.assert_allclose(np.asarray(out_bf16), np.asarray(ref),
                               rtol=3e-2, atol=3e-2)

    print("KERNEL_OK")
</pallas_src>

<mosaic_0001>
module attributes {stable_mosaic.version = 11 : i64} {
  func.func @_kan_kernel(%arg0: i32, %arg1: i32, %arg2: memref<8x256xf32, #tpu.memory_space<vmem>>, %arg3: memref<8x96xf32, #tpu.memory_space<vmem>>, %arg4: memref<8x256xf32, #tpu.memory_space<vmem>>, %arg5: memref<96x256xf32, #tpu.memory_space<vmem>>) attributes {dimension_semantics = [#tpu.dimension_semantics<parallel>, #tpu.dimension_semantics<parallel>], iteration_bounds = array<i64: 1, 4>, scalar_prefetch = 0 : i64, scratch_operands = 1 : i64, tpu.core_type = #tpu.core_type<tc>, window_params = [{transform_indices = @transform_0, window_bounds = array<i64: 8, 256>}, {transform_indices = @transform_1, window_bounds = array<i64: 8, 96>}, {transform_indices = @transform_2, window_bounds = array<i64: 8, 256>}]} {
    %c0 = arith.constant 0 : index
    %c0_0 = arith.constant 0 : index
    %0 = vector.load %arg2[%c0, %c0_0] : memref<8x256xf32, #tpu.memory_space<vmem>>, vector<8x256xf32>
    %cst = arith.constant 0.000000e+00 : f32
    %1 = vector.broadcast %cst : f32 to vector<8x256xf32>
    %2 = arith.cmpf oge, %0, %1 : vector<8x256xf32>
    %cst_1 = arith.constant 1.250000e-01 : f32
    %3 = vector.broadcast %cst_1 : f32 to vector<8x256xf32>
    %4 = arith.cmpf olt, %0, %3 : vector<8x256xf32>
    %5 = arith.andi %2, %4 : vector<8x256xi1>
    %6 = arith.extui %5 : vector<8x256xi1> to vector<8x256xi32>
    %7 = arith.sitofp %6 : vector<8x256xi32> to vector<8x256xf32>
    %cst_2 = arith.constant 1.250000e-01 : f32
    %8 = vector.broadcast %cst_2 : f32 to vector<8x256xf32>
    %9 = arith.cmpf oge, %0, %8 : vector<8x256xf32>
    %cst_3 = arith.constant 2.500000e-01 : f32
    %10 = vector.broadcast %cst_3 : f32 to vector<8x256xf32>
    %11 = arith.cmpf olt, %0, %10 : vector<8x256xf32>
    %12 = arith.andi %9, %11 : vector<8x256xi1>
    %13 = arith.extui %12 : vector<8x256xi1> to vector<8x256xi32>
    %14 = arith.sitofp %13 : vector<8x256xi32> to vector<8x256xf32>
    %cst_4 = arith.constant 2.500000e-01 : f32
    %15 = vector.broadcast %cst_4 : f32 to vector<8x256xf32>
    %16 = arith.cmpf oge, %0, %15 : vector<8x256xf32>
    %cst_5 = arith.constant 3.750000e-01 : f32
    %17 = vector.broadcast %cst_5 : f32 to vector<8x256xf32>
    %18 = arith.cmpf olt, %0, %17 : vector<8x256xf32>
    %19 = arith.andi %16, %18 : vector<8x256xi1>
    %20 = arith.extui %19 : vector<8x256xi1> to vector<8x256xi32>
    %21 = arith.sitofp %20 : vector<8x256xi32> to vector<8x256xf32>
    %cst_6 = arith.constant 3.750000e-01 : f32
    %22 = vector.broadcast %cst_6 : f32 to vector<8x256xf32>
    %23 = arith.cmpf oge, %0, %22 : vector<8x256xf32>
    %cst_7 = arith.constant 5.000000e-01 : f32
    %24 = vector.broadcast %cst_7 : f32 to vector<8x256xf32>
    %25 = arith.cmpf olt, %0, %24 : vector<8x256xf32>
    %26 = arith.andi %23, %25 : vector<8x256xi1>
    %27 = arith.extui %26 : vector<8x256xi1> to vector<8x256xi32>
    %28 = arith.sitofp %27 : vector<8x256xi32> to vector<8x256xf32>
    %cst_8 = arith.constant 5.000000e-01 : f32
    %29 = vector.broadcast %cst_8 : f32 to vector<8x256xf32>
    %30 = arith.cmpf oge, %0, %29 : vector<8x256xf32>
    %cst_9 = arith.constant 6.250000e-01 : f32
    %31 = vector.broadcast %cst_9 : f32 to vector<8x256xf32>
    %32 = arith.cmpf olt, %0, %31 : vector<8x256xf32>
    %33 = arith.andi %30, %32 : vector<8x256xi1>
    %34 = arith.extui %33 : vector<8x256xi1> to vector<8x256xi32>
    %35 = arith.sitofp %34 : vector<8x256xi32> to vector<8x256xf32>
    %cst_10 = arith.constant 6.250000e-01 : f32
    %36 = vector.broadcast %cst_10 : f32 to vector<8x256xf32>
    %37 = arith.cmpf oge, %0, %36 : vector<8x256xf32>
    %cst_11 = arith.constant 7.500000e-01 : f32
    %38 = vector.broadcast %cst_11 : f32 to vector<8x256xf32>
    %39 = arith.cmpf olt, %0, %38 : vector<8x256xf32>
    %40 = arith.andi %37, %39 : vector<8x256xi1>
    %41 = arith.extui %40 : vector<8x256xi1> to vector<8x256xi32>
    %42 = arith.sitofp %41 : vector<8x256xi32> to vector<8x256xf32>
    %cst_12 = arith.constant 7.500000e-01 : f32
    %43 = vector.broadcast %cst_12 : f32 to vector<8x256xf32>
    %44 = arith.cmpf oge, %0, %43 : vector<8x256xf32>
    %cst_13 = arith.constant 8.750000e-01 : f32
    %45 = vector.broadcast %cst_13 : f32 to vector<8x256xf32>
    %46 = arith.cmpf olt, %0, %45 : vector<8x256xf32>
    %47 = arith.andi %44, %46 : vector<8x256xi1>
    %48 = arith.extui %47 : vector<8x256xi1> to vector<8x256xi32>
    %49 = arith.sitofp %48 : vector<8x256xi32> to vector<8x256xf32>
    %cst_14 = arith.constant 8.750000e-01 : f32
    %50 = vector.broadcast %cst_14 : f32 to vector<8x256xf32>
    %51 = arith.cmpf oge, %0, %50 : vector<8x256xf32>
    %cst_15 = arith.constant 1.000000e+00 : f32
    %52 = vector.broadcast %cst_15 : f32 to vector<8x256xf32>
    %53 = arith.cmpf olt, %0, %52 : vector<8x256xf32>
    %54 = arith.andi %51, %53 : vector<8x256xi1>
    %55 = arith.extui %54 : vector<8x256xi1> to vector<8x256xi32>
    %56 = arith.sitofp %55 : vector<8x256xi32> to vector<8x256xf32>
    %cst_16 = arith.constant 0.000000e+00 : f32
    %57 = vector.broadcast %cst_16 : f32 to vector<8x256xf32>
    %cst_17 = arith.constant 1.250000e-01 : f32
    %58 = vector.broadcast %cst_17 : f32 to vector<8x256xf32>
    %59 = arith.subf %58, %0 : vector<8x256xf32>
    %cst_18 = arith.constant 8.000000e+00 : f32
    %60 = vector.broadcast %cst_18 : f32 to vector<8x256xf32>
    %61 = arith.mulf %59, %60 : vector<8x256xf32>
    %62 = arith.mulf %61, %7 : vector<8x256xf32>
    %63 = arith.addf %57, %62 : vector<8x256xf32>
    %cst_19 = arith.constant 0.000000e+00 : f32
    %64 = vector.broadcast %cst_19 : f32 to vector<8x256xf32>
    %cst_20 = arith.constant 0.000000e+00 : f32
    %65 = vector.broadcast %cst_20 : f32 to vector<8x256xf32>
    %66 = arith.subf %0, %65 : vector<8x256xf32>
    %cst_21 = arith.constant 8.000000e+00 : f32
    %67 = vector.broadcast %cst_21 : f32 to vector<8x256xf32>
    %68 = arith.mulf %66, %67 : vector<8x256xf32>
    %69 = arith.mulf %68, %7 : vector<8x256xf32>
    %70 = arith.addf %64, %69 : vector<8x256xf32>
    %cst_22 = arith.constant 2.500000e-01 : f32
    %71 = vector.broadcast %cst_22 : f32 to vector<8x256xf32>
    %72 = arith.subf %71, %0 : vector<8x256xf32>
    %cst_23 = arith.constant 8.000000e+00 : f32
    %73 = vector.broadcast %cst_23 : f32 to vector<8x256xf32>
    %74 = arith.mulf %72, %73 : vector<8x256xf32>
    %75 = arith.mulf %74, %14 : vector<8x256xf32>
    %76 = arith.addf %70, %75 : vector<8x256xf32>
    %cst_24 = arith.constant 0.000000e+00 : f32
    %77 = vector.broadcast %cst_24 : f32 to vector<8x256xf32>
    %cst_25 = arith.constant 1.250000e-01 : f32
    %78 = vector.broadcast %cst_25 : f32 to vector<8x256xf32>
    %79 = arith.subf %0, %78 : vector<8x256xf32>
    %cst_26 = arith.constant 8.000000e+00 : f32
    %80 = vector.broadcast %cst_26 : f32 to vector<8x256xf32>
    %81 = arith.mulf %79, %80 : vector<8x256xf32>
    %82 = arith.mulf %81, %14 : vector<8x256xf32>
    %83 = arith.addf %77, %82 : vector<8x256xf32>
    %cst_27 = arith.constant 3.750000e-01 : f32
    %84 = vector.broadcast %cst_27 : f32 to vector<8x256xf32>
    %85 = arith.subf %84, %0 : vector<8x256xf32>
    %cst_28 = arith.constant 8.000000e+00 : f32
    %86 = vector.broadcast %cst_28 : f32 to vector<8x256xf32>
    %87 = arith.mulf %85, %86 : vector<8x256xf32>
    %88 = arith.mulf %87, %21 : vector<8x256xf32>
    %89 = arith.addf %83, %88 : vector<8x256xf32>
    %cst_29 = arith.constant 0.000000e+00 : f32
    %90 = vector.broadcast %cst_29 : f32 to vector<8x256xf32>
    %cst_30 = arith.constant 2.500000e-01 : f32
    %91 = vector.broadcast %cst_30 : f32 to vector<8x256xf32>
    %92 = arith.subf %0, %91 : vector<8x256xf32>
    %cst_31 = arith.constant 8.000000e+00 : f32
    %93 = vector.broadcast %cst_31 : f32 to vector<8x256xf32>
    %94 = arith.mulf %92, %93 : vector<8x256xf32>
    %95 = arith.mulf %94, %21 : vector<8x256xf32>
    %96 = arith.addf %90, %95 : vector<8x256xf32>
    %cst_32 = arith.constant 5.000000e-01 : f32
    %97 = vector.broadcast %cst_32 : f32 to vector<8x256xf32>
    %98 = arith.subf %97, %0 : vector<8x256xf32>
    %cst_33 = arith.constant 8.000000e+00 : f32
    %99 = vector.broadcast %cst_33 : f32 to vector<8x256xf32>
    %100 = arith.mulf %98, %99 : vector<8x256xf32>
    %101 = arith.mulf %100, %28 : vector<8x256xf32>
    %102 = arith.addf %96, %101 : vector<8x256xf32>
    %cst_34 = arith.constant 0.000000e+00 : f32
    %103 = vector.broadcast %cst_34 : f32 to vector<8x256xf32>
    %cst_35 = arith.constant 3.750000e-01 : f32
    %104 = vector.broadcast %cst_35 : f32 to vector<8x256xf32>
    %105 = arith.subf %0, %104 : vector<8x256xf32>
    %cst_36 = arith.constant 8.000000e+00 : f32
    %106 = vector.broadcast %cst_36 : f32 to vector<8x256xf32>
    %107 = arith.mulf %105, %106 : vector<8x256xf32>
    %108 = arith.mulf %107, %28 : vector<8x256xf32>
    %109 = arith.addf %103, %108 : vector<8x256xf32>
    %cst_37 = arith.constant 6.250000e-01 : f32
    %110 = vector.broadcast %cst_37 : f32 to vector<8x256xf32>
    %111 = arith.subf %110, %0 : vector<8x256xf32>
    %cst_38 = arith.constant 8.000000e+00 : f32
    %112 = vector.broadcast %cst_38 : f32 to vector<8x256xf32>
    %113 = arith.mulf %111, %112 : vector<8x256xf32>
    %114 = arith.mulf %113, %35 : vector<8x256xf32>
    %115 = arith.addf %109, %114 : vector<8x256xf32>
    %cst_39 = arith.constant 0.000000e+00 : f32
    %116 = vector.broadcast %cst_39 : f32 to vector<8x256xf32>
    %cst_40 = arith.constant 5.000000e-01 : f32
    %117 = vector.broadcast %cst_40 : f32 to vector<8x256xf32>
    %118 = arith.subf %0, %117 : vector<8x256xf32>
    %cst_41 = arith.constant 8.000000e+00 : f32
    %119 = vector.broadcast %cst_41 : f32 to vector<8x256xf32>
    %120 = arith.mulf %118, %119 : vector<8x256xf32>
    %121 = arith.mulf %120, %35 : vector<8x256xf32>
    %122 = arith.addf %116, %121 : vector<8x256xf32>
    %cst_42 = arith.constant 7.500000e-01 : f32
    %123 = vector.broadcast %cst_42 : f32 to vector<8x256xf32>
    %124 = arith.subf %123, %0 : vector<8x256xf32>
    %cst_43 = arith.constant 8.000000e+00 : f32
    %125 = vector.broadcast %cst_43 : f32 to vector<8x256xf32>
    %126 = arith.mulf %124, %125 : vector<8x256xf32>
    %127 = arith.mulf %126, %42 : vector<8x256xf32>
    %128 = arith.addf %122, %127 : vector<8x256xf32>
    %cst_44 = arith.constant 0.000000e+00 : f32
    %129 = vector.broadcast %cst_44 : f32 to vector<8x256xf32>
    %cst_45 = arith.constant 6.250000e-01 : f32
    %130 = vector.broadcast %cst_45 : f32 to vector<8x256xf32>
    %131 = arith.subf %0, %130 : vector<8x256xf32>
    %cst_46 = arith.constant 8.000000e+00 : f32
    %132 = vector.broadcast %cst_46 : f32 to vector<8x256xf32>
    %133 = arith.mulf %131, %132 : vector<8x256xf32>
    %134 = arith.mulf %133, %42 : vector<8x256xf32>
    %135 = arith.addf %129, %134 : vector<8x256xf32>
    %cst_47 = arith.constant 8.750000e-01 : f32
    %136 = vector.broadcast %cst_47 : f32 to vector<8x256xf32>
    %137 = arith.subf %136, %0 : vector<8x256xf32>
    %cst_48 = arith.constant 8.000000e+00 : f32
    %138 = vector.broadcast %cst_48 : f32 to vector<8x256xf32>
    %139 = arith.mulf %137, %138 : vector<8x256xf32>
    %140 = arith.mulf %139, %49 : vector<8x256xf32>
    %141 = arith.addf %135, %140 : vector<8x256xf32>
    %cst_49 = arith.constant 0.000000e+00 : f32
    %142 = vector.broadcast %cst_49 : f32 to vector<8x256xf32>
    %cst_50 = arith.constant 7.500000e-01 : f32
    %143 = vector.broadcast %cst_50 : f32 to vector<8x256xf32>
    %144 = arith.subf %0, %143 : vector<8x256xf32>
    %cst_51 = arith.constant 8.000000e+00 : f32
    %145 = vector.broadcast %cst_51 : f32 to vector<8x256xf32>
    %146 = arith.mulf %144, %145 : vector<8x256xf32>
    %147 = arith.mulf %146, %49 : vector<8x256xf32>
    %148 = arith.addf %142, %147 : vector<8x256xf32>
    %cst_52 = arith.constant 1.000000e+00 : f32
    %149 = vector.broadcast %cst_52 : f32 to vector<8x256xf32>
    %150 = arith.subf %149, %0 : vector<8x256xf32>
    %cst_53 = arith.constant 8.000000e+00 : f32
    %151 = vector.broadcast %cst_53 : f32 to vector<8x256xf32>
    %152 = arith.mulf %150, %151 : vector<8x256xf32>
    %153 = arith.mulf %152, %56 : vector<8x256xf32>
    %154 = arith.addf %148, %153 : vector<8x256xf32>
    %cst_54 = arith.constant 0.000000e+00 : f32
    %155 = vector.broadcast %cst_54 : f32 to vector<8x256xf32>
    %cst_55 = arith.constant 8.750000e-01 : f32
    %156 = vector.broadcast %cst_55 : f32 to vector<8x256xf32>
    %157 = arith.subf %0, %156 : vector<8x256xf32>
    %cst_56 = arith.constant 8.000000e+00 : f32
    %158 = vector.broadcast %cst_56 : f32 to vector<8x256xf32>
    %159 = arith.mulf %157, %158 : vector<8x256xf32>
    %160 = arith.mulf %159, %56 : vector<8x256xf32>
    %161 = arith.addf %155, %160 : vector<8x256xf32>
    %cst_57 = arith.constant 0.000000e+00 : f32
    %162 = vector.broadcast %cst_57 : f32 to vector<8x256xf32>
    %cst_58 = arith.constant 1.250000e-01 : f32
    %163 = vector.broadcast %cst_58 : f32 to vector<8x256xf32>
    %164 = arith.subf %163, %0 : vector<8x256xf32>
    %cst_59 = arith.constant 8.000000e+00 : f32
    %165 = vector.broadcast %cst_59 : f32 to vector<8x256xf32>
    %166 = arith.mulf %164, %165 : vector<8x256xf32>
    %167 = arith.mulf %166, %63 : vector<8x256xf32>
    %168 = arith.addf %162, %167 : vector<8x256xf32>
    %cst_60 = arith.constant 0.000000e+00 : f32
    %169 = vector.broadcast %cst_60 : f32 to vector<8x256xf32>
    %cst_61 = arith.constant 0.000000e+00 : f32
    %170 = vector.broadcast %cst_61 : f32 to vector<8x256xf32>
    %171 = arith.subf %0, %170 : vector<8x256xf32>
    %cst_62 = arith.constant 8.000000e+00 : f32
    %172 = vector.broadcast %cst_62 : f32 to vector<8x256xf32>
    %173 = arith.mulf %171, %172 : vector<8x256xf32>
    %174 = arith.mulf %173, %63 : vector<8x256xf32>
    %175 = arith.addf %169, %174 : vector<8x256xf32>
    %cst_63 = arith.constant 2.500000e-01 : f32
    %176 = vector.broadcast %cst_63 : f32 to vector<8x256xf32>
    %177 = arith.subf %176, %0 : vector<8x256xf32>
    %cst_64 = arith.constant 4.000000e+00 : f32
    %178 = vector.broadcast %cst_64 : f32 to vector<8x256xf32>
    %179 = arith.mulf %177, %178 : vector<8x256xf32>
    %180 = arith.mulf %179, %76 : vector<8x256xf32>
    %181 = arith.addf %175, %180 : vector<8x256xf32>
    %cst_65 = arith.constant 0.000000e+00 : f32
    %182 = vector.broadcast %cst_65 : f32 to vector<8x256xf32>
    %cst_66 = arith.constant 0.000000e+00 : f32
    %183 = vector.broadcast %cst_66 : f32 to vector<8x256xf32>
    %184 = arith.subf %0, %183 : vector<8x256xf32>
    %cst_67 = arith.constant 4.000000e+00 : f32
    %185 = vector.broadcast %cst_67 : f32 to vector<8x256xf32>
    %186 = arith.mulf %184, %185 : vector<8x256xf32>
    %187 = arith.mulf %186, %76 : vector<8x256xf32>
    %188 = arith.addf %182, %187 : vector<8x256xf32>
    %cst_68 = arith.constant 3.750000e-01 : f32
    %189 = vector.broadcast %cst_68 : f32 to vector<8x256xf32>
    %190 = arith.subf %189, %0 : vector<8x256xf32>
    %cst_69 = arith.constant 4.000000e+00 : f32
    %191 = vector.broadcast %cst_69 : f32 to vector<8x256xf32>
    %192 = arith.mulf %190, %191 : vector<8x256xf32>
    %193 = arith.mulf %192, %89 : vector<8x256xf32>
    %194 = arith.addf %188, %193 : vector<8x256xf32>
    %cst_70 = arith.constant 0.000000e+00 : f32
    %195 = vector.broadcast %cst_70 : f32 to vector<8x256xf32>
    %cst_71 = arith.constant 1.250000e-01 : f32
    %196 = vector.broadcast %cst_71 : f32 to vector<8x256xf32>
    %197 = arith.subf %0, %196 : vector<8x256xf32>
    %cst_72 = arith.constant 4.000000e+00 : f32
    %198 = vector.broadcast %cst_72 : f32 to vector<8x256xf32>
    %199 = arith.mulf %197, %198 : vector<8x256xf32>
    %200 = arith.mulf %199, %89 : vector<8x256xf32>
    %201 = arith.addf %195, %200 : vector<8x256xf32>
    %cst_73 = arith.constant 5.000000e-01 : f32
    %202 = vector.broadcast %cst_73 : f32 to vector<8x256xf32>
    %203 = arith.subf %202, %0 : vector<8x256xf32>
    %cst_74 = arith.constant 4.000000e+00 : f32
    %204 = vector.broadcast %cst_74 : f32 to vector<8x256xf32>
    %205 = arith.mulf %203, %204 : vector<8x256xf32>
    %206 = arith.mulf %205, %102 : vector<8x256xf32>
    %207 = arith.addf %201, %206 : vector<8x256xf32>
    %cst_75 = arith.constant 0.000000e+00 : f32
    %208 = vector.broadcast %cst_75 : f32 to vector<8x256xf32>
    %cst_76 = arith.constant 2.500000e-01 : f32
    %209 = vector.broadcast %cst_76 : f32 to vector<8x256xf32>
    %210 = arith.subf %0, %209 : vector<8x256xf32>
    %cst_77 = arith.constant 4.000000e+00 : f32
    %211 = vector.broadcast %cst_77 : f32 to vector<8x256xf32>
    %212 = arith.mulf %210, %211 : vector<8x256xf32>
    %213 = arith.mulf %212, %102 : vector<8x256xf32>
    %214 = arith.addf %208, %213 : vector<8x256xf32>
    %cst_78 = arith.constant 6.250000e-01 : f32
    %215 = vector.broadcast %cst_78 : f32 to vector<8x256xf32>
    %216 = arith.subf %215, %0 : vector<8x256xf32>
    %cst_79 = arith.constant 4.000000e+00 : f32
    %217 = vector.broadcast %cst_79 : f32 to vector<8x256xf32>
    %218 = arith.mulf %216, %217 : vector<8x256xf32>
    %219 = arith.mulf %218, %115 : vector<8x256xf32>
    %220 = arith.addf %214, %219 : vector<8x256xf32>
    %cst_80 = arith.constant 0.000000e+00 : f32
    %221 = vector.broadcast %cst_80 : f32 to vector<8x256xf32>
    %cst_81 = arith.constant 3.750000e-01 : f32
    %222 = vector.broadcast %cst_81 : f32 to vector<8x256xf32>
    %223 = arith.subf %0, %222 : vector<8x256xf32>
    %cst_82 = arith.constant 4.000000e+00 : f32
    %224 = vector.broadcast %cst_82 : f32 to vector<8x256xf32>
    %225 = arith.mulf %223, %224 : vector<8x256xf32>
    %226 = arith.mulf %225, %115 : vector<8x256xf32>
    %227 = arith.addf %221, %226 : vector<8x256xf32>
    %cst_83 = arith.constant 7.500000e-01 : f32
    %228 = vector.broadcast %cst_83 : f32 to vector<8x256xf32>
    %229 = arith.subf %228, %0 : vector<8x256xf32>
    %cst_84 = arith.constant 4.000000e+00 : f32
    %230 = vector.broadcast %cst_84 : f32 to vector<8x256xf32>
    %231 = arith.mulf %229, %230 : vector<8x256xf32>
    %232 = arith.mulf %231, %128 : vector<8x256xf32>
    %233 = arith.addf %227, %232 : vector<8x256xf32>
    %cst_85 = arith.constant 0.000000e+00 : f32
    %234 = vector.broadcast %cst_85 : f32 to vector<8x256xf32>
    %cst_86 = arith.constant 5.000000e-01 : f32
    %235 = vector.broadcast %cst_86 : f32 to vector<8x256xf32>
    %236 = arith.subf %0, %235 : vector<8x256xf32>
    %cst_87 = arith.constant 4.000000e+00 : f32
    %237 = vector.broadcast %cst_87 : f32 to vector<8x256xf32>
    %238 = arith.mulf %236, %237 : vector<8x256xf32>
    %239 = arith.mulf %238, %128 : vector<8x256xf32>
    %240 = arith.addf %234, %239 : vector<8x256xf32>
    %cst_88 = arith.constant 8.750000e-01 : f32
    %241 = vector.broadcast %cst_88 : f32 to vector<8x256xf32>
    %242 = arith.subf %241, %0 : vector<8x256xf32>
    %cst_89 = arith.constant 4.000000e+00 : f32
    %243 = vector.broadcast %cst_89 : f32 to vector<8x256xf32>
    %244 = arith.mulf %242, %243 : vector<8x256xf32>
    %245 = arith.mulf %244, %141 : vector<8x256xf32>
    %246 = arith.addf %240, %245 : vector<8x256xf32>
    %cst_90 = arith.constant 0.000000e+00 : f32
    %247 = vector.broadcast %cst_90 : f32 to vector<8x256xf32>
    %cst_91 = arith.constant 6.250000e-01 : f32
    %248 = vector.broadcast %cst_91 : f32 to vector<8x256xf32>
    %249 = arith.subf %0, %248 : vector<8x256xf32>
    %cst_92 = arith.constant 4.000000e+00 : f32
    %250 = vector.broadcast %cst_92 : f32 to vector<8x256xf32>
    %251 = arith.mulf %249, %250 : vector<8x256xf32>
    %252 = arith.mulf %251, %141 : vector<8x256xf32>
    %253 = arith.addf %247, %252 : vector<8x256xf32>
    %cst_93 = arith.constant 1.000000e+00 : f32
    %254 = vector.broadcast %cst_93 : f32 to vector<8x256xf32>
    %255 = arith.subf %254, %0 : vector<8x256xf32>
    %cst_94 = arith.constant 4.000000e+00 : f32
    %256 = vector.broadcast %cst_94 : f32 to vector<8x256xf32>
    %257 = arith.mulf %255, %256 : vector<8x256xf32>
    %258 = arith.mulf %257, %154 : vector<8x256xf32>
    %259 = arith.addf %253, %258 : vector<8x256xf32>
    %cst_95 = arith.constant 0.000000e+00 : f32
    %260 = vector.broadcast %cst_95 : f32 to vector<8x256xf32>
    %cst_96 = arith.constant 7.500000e-01 : f32
    %261 = vector.broadcast %cst_96 : f32 to vector<8x256xf32>
    %262 = arith.subf %0, %261 : vector<8x256xf32>
    %cst_97 = arith.constant 4.000000e+00 : f32
    %263 = vector.broadcast %cst_97 : f32 to vector<8x256xf32>
    %264 = arith.mulf %262, %263 : vector<8x256xf32>
    %265 = arith.mulf %264, %154 : vector<8x256xf32>
    %266 = arith.addf %260, %265 : vector<8x256xf32>
    %cst_98 = arith.constant 1.000000e+00 : f32
    %267 = vector.broadcast %cst_98 : f32 to vector<8x256xf32>
    %268 = arith.subf %267, %0 : vector<8x256xf32>
    %cst_99 = arith.constant 8.000000e+00 : f32
    %269 = vector.broadcast %cst_99 : f32 to vector<8x256xf32>
    %270 = arith.mulf %268, %269 : vector<8x256xf32>
    %271 = arith.mulf %270, %161 : vector<8x256xf32>
    %272 = arith.addf %266, %271 : vector<8x256xf32>
    %cst_100 = arith.constant 0.000000e+00 : f32
    %273 = vector.broadcast %cst_100 : f32 to vector<8x256xf32>
    %cst_101 = arith.constant 8.750000e-01 : f32
    %274 = vector.broadcast %cst_101 : f32 to vector<8x256xf32>
    %275 = arith.subf %0, %274 : vector<8x256xf32>
    %cst_102 = arith.constant 8.000000e+00 : f32
    %276 = vector.broadcast %cst_102 : f32 to vector<8x256xf32>
    %277 = arith.mulf %275, %276 : vector<8x256xf32>
    %278 = arith.mulf %277, %161 : vector<8x256xf32>
    %279 = arith.addf %273, %278 : vector<8x256xf32>
    %cst_103 = arith.constant 0.000000e+00 : f32
    %280 = vector.broadcast %cst_103 : f32 to vector<8x256xf32>
    %cst_104 = arith.constant 1.250000e-01 : f32
    %281 = vector.broadcast %cst_104 : f32 to vector<8x256xf32>
    %282 = arith.subf %281, %0 : vector<8x256xf32>
    %cst_105 = arith.constant 8.000000e+00 : f32
    %283 = vector.broadcast %cst_105 : f32 to vector<8x256xf32>
    %284 = arith.mulf %282, %283 : vector<8x256xf32>
    %285 = arith.mulf %284, %168 : vector<8x256xf32>
    %286 = arith.addf %280, %285 : vector<8x256xf32>
    %c0_106 = arith.constant 0 : index
    %c0_107 = arith.constant 0 : index
    %287 = vector.load %arg5[%c0_106, %c0_107] : memref<96x256xf32, #tpu.memory_space<vmem>>, vector<8x256xf32>
    tpu.vector_store %arg5[%c0_106, %c0_107], %286 {strides = array<i32>} : memref<96x256xf32, #tpu.memory_space<vmem>>, vector<8x256xf32>,
    %cst_108 = arith.constant 0.000000e+00 : f32
    %288 = vector.broadcast %cst_108 : f32 to vector<8x256xf32>
    %cst_109 = arith.constant 0.000000e+00 : f32
    %289 = vector.broadcast %cst_109 : f32 to vector<8x256xf32>
    %290 = arith.subf %0, %289 : vector<8x256xf32>
    %cst_110 = arith.constant 8.000000e+00 : f32
    %291 = vector.broadcast %cst_110 : f32 to vector<8x256xf32>
    %292 = arith.mulf %290, %291 : vector<8x256xf32>
    %293 = arith.mulf %292, %168 : vector<8x256xf32>
    %294 = arith.addf %288, %293 : vector<8x256xf32>
    %cst_111 = arith.constant 2.500000e-01 : f32
    %295 = vector.broadcast %cst_111 : f32 to vector<8x256xf32>
    %296 = arith.subf %295, %0 : vector<8x256xf32>
    %cst_112 = arith.constant 4.000000e+00 : f32
    %297 = vector.broadcast %cst_112 : f32 to vector<8x256xf32>
    %298 = arith.mulf %296, %297 : vector<8x256xf32>
    %299 = arith.mulf %298, %181 : vector<8x256xf32>
    %300 = arith.addf %294, %299 : vector<8x256xf32>
    %c8 = arith.constant 8 : index
    %c0_113 = arith.constant 0 : index
    %301 = vector.load %arg5[%c8, %c0_113] : memref<96x256xf32, #tpu.memory_space<vmem>>, vector<8x256xf32>
    tpu.vector_store %arg5[%c8, %c0_113], %300 {strides = array<i32>} : memref<96x256xf32, #tpu.memory_space<vmem>>, vector<8x256xf32>,
    %cst_114 = arith.constant 0.000000e+00 : f32
    %302 = vector.broadcast %cst_114 : f32 to vector<8x256xf32>
    %cst_115 = arith.constant 0.000000e+00 : f32
    %303 = vector.broadcast %cst_115 : f32 to vector<8x256xf32>
    %304 = arith.subf %0, %303 : vector<8x256xf32>
    %cst_116 = arith.constant 4.000000e+00 : f32
    %305 = vector.broadcast %cst_116 : f32 to vector<8x256xf32>
    %306 = arith.mulf %304, %305 : vector<8x256xf32>
    %307 = arith.mulf %306, %181 : vector<8x256xf32>
    %308 = arith.addf %302, %307 : vector<8x256xf32>
    %cst_117 = arith.constant 3.750000e-01 : f32
    %309 = vector.broadcast %cst_117 : f32 to vector<8x256xf32>
    %310 = arith.subf %309, %0 : vector<8x256xf32>
    %cst_118 = arith.constant 2.66666675 : f32
    %311 = vector.broadcast %cst_118 : f32 to vector<8x256xf32>
    %312 = arith.mulf %310, %311 : vector<8x256xf32>
    %313 = arith.mulf %312, %194 : vector<8x256xf32>
    %314 = arith.addf %308, %313 : vector<8x256xf32>
    %c16 = arith.constant 16 : index
    %c0_119 = arith.constant 0 : index
    %315 = vector.load %arg5[%c16, %c0_119] : memref<96x256xf32, #tpu.memory_space<vmem>>, vector<8x256xf32>
    tpu.vector_store %arg5[%c16, %c0_119], %314 {strides = array<i32>} : memref<96x256xf32, #tpu.memory_space<vmem>>, vector<8x256xf32>,
    %cst_120 = arith.constant 0.000000e+00 : f32
    %316 = vector.broadcast %cst_120 : f32 to vector<8x256xf32>
    %cst_121 = arith.constant 0.000000e+00 : f32
    %317 = vector.broadcast %cst_121 : f32 to vector<8x256xf32>
    %318 = arith.subf %0, %317 : vector<8x256xf32>
    %cst_122 = arith.constant 2.66666675 : f32
    %319 = vector.broadcast %cst_122 : f32 to vector<8x256xf32>
    %320 = arith.mulf %318, %319 : vector<8x256xf32>
    %321 = arith.mulf %320, %194 : vector<8x256xf32>
    %322 = arith.addf %316, %321 : vector<8x256xf32>
    %cst_123 = arith.constant 5.000000e-01 : f32
    %323 = vector.broadcast %cst_123 : f32 to vector<8x256xf32>
    %324 = arith.subf %323, %0 : vector<8x256xf32>
    %cst_124 = arith.constant 2.66666675 : f32
    %325 = vector.broadcast %cst_124 : f32 to vector<8x256xf32>
    %326 = arith.mulf %324, %325 : vector<8x256xf32>
    %327 = arith.mulf %326, %207 : vector<8x256xf32>
    %328 = arith.addf %322, %327 : vector<8x256xf32>
    %c24 = arith.constant 24 : index
    %c0_125 = arith.constant 0 : index
    %329 = vector.load %arg5[%c24, %c0_125] : memref<96x256xf32, #tpu.memory_space<vmem>>, vector<8x256xf32>
    tpu.vector_store %arg5[%c24, %c0_125], %328 {strides = array<i32>} : memref<96x256xf32, #tpu.memory_space<vmem>>, vector<8x256xf32>,
    %cst_126 = arith.constant 0.000000e+00 : f32
    %330 = vector.broadcast %cst_126 : f32 to vector<8x256xf32>
    %cst_127 = arith.constant 1.250000e-01 : f32
    %331 = vector.broadcast %cst_127 : f32 to vector<8x256xf32>
    %332 = arith.subf %0, %331 : vector<8x256xf32>
    %cst_128 = arith.constant 2.66666675 : f32
    %333 = vector.broadcast %cst_128 : f32 to vector<8x256xf32>
    %334 = arith.mulf %332, %333 : vector<8x256xf32>
    %335 = arith.mulf %334, %207 : vector<8x256xf32>
    %336 = arith.addf %330, %335 : vector<8x256xf32>
    %cst_129 = arith.constant 6.250000e-01 : f32
    %337 = vector.broadcast %cst_129 : f32 to vector<8x256xf32>
    %338 = arith.subf %337, %0 : vector<8x256xf32>
    %cst_130 = arith.constant 2.66666675 : f32
    %339 = vector.broadcast %cst_130 : f32 to vector<8x256xf32>
    %340 = arith.mulf %338, %339 : vector<8x256xf32>
    %341 = arith.mulf %340, %220 : vector<8x256xf32>
    %342 = arith.addf %336, %341 : vector<8x256xf32>
    %c32 = arith.constant 32 : index
    %c0_131 = arith.constant 0 : index
    %343 = vector.load %arg5[%c32, %c0_131] : memref<96x256xf32, #tpu.memory_space<vmem>>, vector<8x256xf32>
    tpu.vector_store %arg5[%c32, %c0_131], %342 {strides = array<i32>} : memref<96x256xf32, #tpu.memory_space<vmem>>, vector<8x256xf32>,
    %cst_132 = arith.constant 0.000000e+00 : f32
    %344 = vector.broadcast %cst_132 : f32 to vector<8x256xf32>
    %cst_133 = arith.constant 2.500000e-01 : f32
    %345 = vector.broadcast %cst_133 : f32 to vector<8x256xf32>
    %346 = arith.subf %0, %345 : vector<8x256xf32>
    %cst_134 = arith.constant 2.66666675 : f32
    %347 = vector.broadcast %cst_134 : f32 to vector<8x256xf32>
    %348 = arith.mulf %346, %347 : vector<8x256xf32>
    %349 = arith.mulf %348, %220 : vector<8x256xf32>
    %350 = arith.addf %344, %349 : vector<8x256xf32>
    %cst_135 = arith.constant 7.500000e-01 : f32
    %351 = vector.broadcast %cst_135 : f32 to vector<8x256xf32>
    %352 = arith.subf %351, %0 : vector<8x256xf32>
    %cst_136 = arith.constant 2.66666675 : f32
    %353 = vector.broadcast %cst_136 : f32 to vector<8x256xf32>
    %354 = arith.mulf %352, %353 : vector<8x256xf32>
    %355 = arith.mulf %354, %233 : vector<8x256xf32>
    %356 = arith.addf %350, %355 : vector<8x256xf32>
    %c40 = arith.constant 40 : index
    %c0_137 = arith.constant 0 : index
    %357 = vector.load %arg5[%c40, %c0_137] : memref<96x256xf32, #tpu.memory_space<vmem>>, vector<8x256xf32>
    tpu.vector_store %arg5[%c40, %c0_137], %356 {strides = array<i32>} : memref<96x256xf32, #tpu.memory_space<vmem>>, vector<8x256xf32>,
    %cst_138 = arith.constant 0.000000e+00 : f32
    %358 = vector.broadcast %cst_138 : f32 to vector<8x256xf32>
    %cst_139 = arith.constant 3.750000e-01 : f32
    %359 = vector.broadcast %cst_139 : f32 to vector<8x256xf32>
    %360 = arith.subf %0, %359 : vector<8x256xf32>
    %cst_140 = arith.constant 2.66666675 : f32
    %361 = vector.broadcast %cst_140 : f32 to vector<8x256xf32>
    %362 = arith.mulf %360, %361 : vector<8x256xf32>
    %363 = arith.mulf %362, %233 : vector<8x256xf32>
    %364 = arith.addf %358, %363 : vector<8x256xf32>
    %cst_141 = arith.constant 8.750000e-01 : f32
    %365 = vector.broadcast %cst_141 : f32 to vector<8x256xf32>
    %366 = arith.subf %365, %0 : vector<8x256xf32>
    %cst_142 = arith.constant 2.66666675 : f32
    %367 = vector.broadcast %cst_142 : f32 to vector<8x256xf32>
    %368 = arith.mulf %366, %367 : vector<8x256xf32>
    %369 = arith.mulf %368, %246 : vector<8x256xf32>
    %370 = arith.addf %364, %369 : vector<8x256xf32>
    %c48 = arith.constant 48 : index
    %c0_143 = arith.constant 0 : index
    %371 = vector.load %arg5[%c48, %c0_143] : memref<96x256xf32, #tpu.memory_space<vmem>>, vector<8x256xf32>
    tpu.vector_store %arg5[%c48, %c0_143], %370 {strides = array<i32>} : memref<96x256xf32, #tpu.memory_space<vmem>>, vector<8x256xf32>,
    %cst_144 = arith.constant 0.000000e+00 : f32
    %372 = vector.broadcast %cst_144 : f32 to vector<8x256xf32>
    %cst_145 = arith.constant 5.000000e-01 : f32
    %373 = vector.broadcast %cst_145 : f32 to vector<8x256xf32>
    %374 = arith.subf %0, %373 : vector<8x256xf32>
    %cst_146 = arith.constant 2.66666675 : f32
    %375 = vector.broadcast %cst_146 : f32 to vector<8x256xf32>
    %376 = arith.mulf %374, %375 : vector<8x256xf32>
    %377 = arith.mulf %376, %246 : vector<8x256xf32>
    %378 = arith.addf %372, %377 : vector<8x256xf32>
    %cst_147 = arith.constant 1.000000e+00 : f32
    %379 = vector.broadcast %cst_147 : f32 to vector<8x256xf32>
    %380 = arith.subf %379, %0 : vector<8x256xf32>
    %cst_148 = arith.constant 2.66666675 : f32
    %381 = vector.broadcast %cst_148 : f32 to vector<8x256xf32>
    %382 = arith.mulf %380, %381 : vector<8x256xf32>
    %383 = arith.mulf %382, %259 : vector<8x256xf32>
    %384 = arith.addf %378, %383 : vector<8x256xf32>
    %c56 = arith.constant 56 : index
    %c0_149 = arith.constant 0 : index
    %385 = vector.load %arg5[%c56, %c0_149] : memref<96x256xf32, #tpu.memory_space<vmem>>, vector<8x256xf32>
    tpu.vector_store %arg5[%c56, %c0_149], %384 {strides = array<i32>} : memref<96x256xf32, #tpu.memory_space<vmem>>, vector<8x256xf32>,
    %cst_150 = arith.constant 0.000000e+00 : f32
    %386 = vector.broadcast %cst_150 : f32 to vector<8x256xf32>
    %cst_151 = arith.constant 6.250000e-01 : f32
    %387 = vector.broadcast %cst_151 : f32 to vector<8x256xf32>
    %388 = arith.subf %0, %387 : vector<8x256xf32>
    %cst_152 = arith.constant 2.66666675 : f32
    %389 = vector.broadcast %cst_152 : f32 to vector<8x256xf32>
    %390 = arith.mulf %388, %389 : vector<8x256xf32>
    %391 = arith.mulf %390, %259 : vector<8x256xf32>
    %392 = arith.addf %386, %391 : vector<8x256xf32>
    %cst_153 = arith.constant 1.000000e+00 : f32
    %393 = vector.broadcast %cst_153 : f32 to vector<8x256xf32>
    %394 = arith.subf %393, %0 : vector<8x256xf32>
    %cst_154 = arith.constant 4.000000e+00 : f32
    %395 = vector.broadcast %cst_154 : f32 to vector<8x256xf32>
    %396 = arith.mulf %394, %395 : vector<8x256xf32>
    %397 = arith.mulf %396, %272 : vector<8x256xf32>
    %398 = arith.addf %392, %397 : vector<8x256xf32>
    %c64 = arith.constant 64 : index
    %c0_155 = arith.constant 0 : index
    %399 = vector.load %arg5[%c64, %c0_155] : memref<96x256xf32, #tpu.memory_space<vmem>>, vector<8x256xf32>
    tpu.vector_store %arg5[%c64, %c0_155], %398 {strides = array<i32>} : memref<96x256xf32, #tpu.memory_space<vmem>>, vector<8x256xf32>,
    %cst_156 = arith.constant 0.000000e+00 : f32
    %400 = vector.broadcast %cst_156 : f32 to vector<8x256xf32>
    %cst_157 = arith.constant 7.500000e-01 : f32
    %401 = vector.broadcast %cst_157 : f32 to vector<8x256xf32>
    %402 = arith.subf %0, %401 : vector<8x256xf32>
    %cst_158 = arith.constant 4.000000e+00 : f32
    %403 = vector.broadcast %cst_158 : f32 to vector<8x256xf32>
    %404 = arith.mulf %402, %403 : vector<8x256xf32>
    %405 = arith.mulf %404, %272 : vector<8x256xf32>
    %406 = arith.addf %400, %405 : vector<8x256xf32>
    %cst_159 = arith.constant 1.000000e+00 : f32
    %407 = vector.broadcast %cst_159 : f32 to vector<8x256xf32>
    %408 = arith.subf %407, %0 : vector<8x256xf32>
    %cst_160 = arith.constant 8.000000e+00 : f32
    %409 = vector.broadcast %cst_160 : f32 to vector<8x256xf32>
    %410 = arith.mulf %408, %409 : vector<8x256xf32>
    %411 = arith.mulf %410, %279 : vector<8x256xf32>
    %412 = arith.addf %406, %411 : vector<8x256xf32>
    %c72 = arith.constant 72 : index
    %c0_161 = arith.constant 0 : index
    %413 = vector.load %arg5[%c72, %c0_161] : memref<96x256xf32, #tpu.memory_space<vmem>>, vector<8x256xf32>
    tpu.vector_store %arg5[%c72, %c0_161], %412 {strides = array<i32>} : memref<96x256xf32, #tpu.memory_space<vmem>>, vector<8x256xf32>,
    %cst_162 = arith.constant 0.000000e+00 : f32
    %414 = vector.broadcast %cst_162 : f32 to vector<8x256xf32>
    %cst_163 = arith.constant 8.750000e-01 : f32
    %415 = vector.broadcast %cst_163 : f32 to vector<8x256xf32>
    %416 = arith.subf %0, %415 : vector<8x256xf32>
    %cst_164 = arith.constant 8.000000e+00 : f32
    %417 = vector.broadcast %cst_164 : f32 to vector<8x256xf32>
    %418 = arith.mulf %416, %417 : vector<8x256xf32>
    %419 = arith.mulf %418, %279 : vector<8x256xf32>
    %420 = arith.addf %414, %419 : vector<8x256xf32>
    %c80 = arith.constant 80 : index
    %c0_165 = arith.constant 0 : index
    %421 = vector.load %arg5[%c80, %c0_165] : memref<96x256xf32, #tpu.memory_space<vmem>>, vector<8x256xf32>
    tpu.vector_store %arg5[%c80, %c0_165], %420 {strides = array<i32>} : memref<96x256xf32, #tpu.memory_space<vmem>>, vector<8x256xf32>,
    %422 = arith.negf %0 : vector<8x256xf32>
    %423 = math.exp %422 : vector<8x256xf32>
    %cst_166 = arith.constant 1.000000e+00 : f32
    %424 = vector.broadcast %cst_166 : f32 to vector<8x256xf32>
    %425 = arith.addf %424, %423 : vector<8x256xf32>
    %426 = arith.divf %424, %425 : vector<8x256xf32>
    %427 = arith.mulf %0, %426 : vector<8x256xf32>
    %c88 = arith.constant 88 : index
    %c0_167 = arith.constant 0 : index
    %428 = vector.load %arg5[%c88, %c0_167] : memref<96x256xf32, #tpu.memory_space<vmem>>, vector<8x256xf32>
    tpu.vector_store %arg5[%c88, %c0_167], %427 {strides = array<i32>} : memref<96x256xf32, #tpu.memory_space<vmem>>, vector<8x256xf32>,
    %c0_168 = arith.constant 0 : index
    %c0_169 = arith.constant 0 : index
    %429 = vector.load %arg5[%c0_168, %c0_169] : memref<96x256xf32, #tpu.memory_space<vmem>>, vector<96x256xf32>
    %c0_170 = arith.constant 0 : index
    %c0_171 = arith.constant 0 : index
    %430 = vector.load %arg3[%c0_170, %c0_171] : memref<8x96xf32, #tpu.memory_space<vmem>>, vector<8x96xf32>
    %cst_172 = arith.constant dense<0.000000e+00> : vector<8x256xf32>
    %431 = tpu.matmul %430, %429, %cst_172 {dimension_numbers = #tpu.dot_dimension_numbers<[1], [0], [0], [1], [0, 0, 1, 1], [], []>} : vector<8x96xf32>, vector<96x256xf32>, vector<8x256xf32> -> vector<8x256xf32>
    %c0_173 = arith.constant 0 : index
    %c0_174 = arith.constant 0 : index
    %432 = vector.load %arg4[%c0_173, %c0_174] : memref<8x256xf32, #tpu.memory_space<vmem>>, vector<8x256xf32>
    tpu.vector_store %arg4[%c0_173, %c0_174], %431 {strides = array<i32>} : memref<8x256xf32, #tpu.memory_space<vmem>>, vector<8x256xf32>,
    return
  }
  func.func @transform_0(%arg0: i32, %arg1: i32) -> (i32, i32) {
    %c0_i32 = arith.constant 0 : i32
    %c0_i32_0 = arith.constant 0 : i32
    return %c0_i32, %arg1 : i32, i32
  }
  func.func @transform_1(%arg0: i32, %arg1: i32) -> (i32, i32) {
    %c0_i32 = arith.constant 0 : i32
    %c0_i32_0 = arith.constant 0 : i32
    return %arg0, %c0_i32 : i32, i32
  }
  func.func @transform_2(%arg0: i32, %arg1: i32) -> (i32, i32) {
    %c0_i32 = arith.constant 0 : i32
    return %arg0, %arg1 : i32, i32
  }
}

</mosaic_0001>

<llo_original>
// kernel: tpu_custom_call.1
$region0: #{tpu_custom_call.1}
  #allocation0 [shape = 'u32[]', space=smem, size = 0x4, offset = 0x4, fixed_abs, tag = 'smem constant byte address 0x4 - core index']
  #allocation1 [shape = 'u32[72,128]{1,0:T(1,128)}', space=vmem, size = 0x9000, scoped, tag = 'internal scratch']
  #allocation2 [shape = 'f32[96,256]{1,0:T(8,128)}', space=vmem, size = 0x18000, scoped, tag = 'scratch operand']
  %s0 = inlined_call_operand.hbm [shape: f32[8,1024], index: 0, kind: input, shape index: {}]
  %s1 = inlined_call_operand.hbm [shape: f32[8,96], index: 1, kind: input, shape index: {}]
  %s2 = inlined_call_operand.hbm [shape: f32[8,1024], index: 2, kind: output, shape index: {}]
  %s3 = sld [smem:[#allocation0]]
  $region49: #{tpu_custom_call.1} parent=0
    _
  %s5 = ssub.s32 1, %s3
  %s6 = scalar_select 0, %s5, %s3
  $region1: #{tpu_custom_call.1} parent=0
    #allocation3 [shape = 'u8[16384]{0}', space=vmem, size = 0x4000, scoped, tag = 'input window, operand 0']
    #allocation4 [shape = 's32[2]{0}', space=sflag, size = 0x8, scoped, tag = 'scoped memory for tpu_custom_call.1']
    #allocation5 [shape = 's32[2]{0}', space=sflag, size = 0x8, scoped, tag = 'scoped memory for tpu_custom_call.1']
    #allocation6 [shape = 'u8[4096]{0}', space=vmem, size = 0x1000, scoped, tag = 'input window, operand 1, single buffered']
    #allocation7 [shape = 's32[1]{0}', space=sflag, size = 0x4, scoped, tag = 'scoped memory for tpu_custom_call.1']
    #allocation8 [shape = 'u8[16384]{0}', space=vmem, size = 0x4000, scoped, tag = 'output window, operand 0']
    %7 = vsyncpa [#allocation4], 0
    %s8 = scalar_lea.sflag [#allocation4], 1
    %9 = vsyncpa %s8, 0
    %10 = vsyncpa [#allocation7], 0
    %11 = vsyncpa [#allocation5], 0
    %s12 = scalar_lea.sflag [#allocation5], 1
    %13 = vsyncpa %s12, 0
    loop: start=0, step=1, limit=6
    $region2: #{tpu_custom_call.1} parent=1 // loop_pre_header
      _
    $region3: #{tpu_custom_call.1} parent=1 // loop_header
      %s15 = sphi 0, %s19
      %p16 = scmp.ge.s32.totalorder %s15, 6
      %s22 = sphi 0, %s34
      %s23 = sphi 0, %s30
      %s24 = sphi 0, %s22
      %s25 = sphi 0, %s23
      %s26 = sphi 0, %s24
      %s27 = sphi 0, %s25
      %s37 = sphi 0, %s39
      %s40 = sphi 0, %s37
      %s41 = sphi 0, %s40
      %s57 = sphi 0, %s41
      %s63 = sphi 0, %s65
      %s66 = sphi 0, %s63
      %s67 = sphi 0, %s66
      %s83 = sphi 0, %s67
      %s91 = sphi 0, %s93
      %s94 = sphi 0, %s91
      %s95 = sphi 0, %s94
      %s111 = sphi 0, %s95
    $region4: #{tpu_custom_call.1} parent=1 // loop_header_branch
      %18 = sbr.rel (%p16) target = $region8
    $region5: #{tpu_custom_call.1} parent=1 // loop_body
      %s20 = ssub.s32 %s15, 1
      %s21 = ssub.s32 %s15, 2
      %s28 = sadd.s32 1, %s23
      %p29 = scmp.ge.s32.totalorder %s28, 4
      %s30 = scalar_select %p29, 0, %s28
      %s31 = sadd.s32 1, %s22
      %s32 = scalar_select %p29, %s31, %s22
      %p33 = scmp.ge.s32.totalorder %s32, 1
      %s34 = scalar_select %p33, 0, %s32
      %s35 = ssub.s32 %s23, %s30
      %p36 = scmp.eq.s32.totalorder %s35, 0
      %s38 = sadd.s32 %s37, 1
      %s39 = scalar_select %p36, %s37, %s38
      %p42 = pneg %p36
      %p43 = scmp.eq.s32.totalorder %s15, 3
      %p44 = por %p42, %p43
      %p45 = scmp.ne.s32.totalorder %s37, %s40
      %p46 = scmp.eq.s32.totalorder %s15, 0
      %p47 = por %p45, %p46
      %p48 = scmp.ne.s32.totalorder %s37, %s40
      %p49 = scmp.eq.s32.totalorder %s20, 3
      %p50 = por %p48, %p49
      %p51 = scmp.ne.s32.totalorder %s40, %s41
      %p52 = scmp.eq.s32.totalorder %s20, 0
      %p53 = por %p51, %p52
      %p54 = scmp.ne.s32.totalorder %s40, %s41
      %p55 = scmp.eq.s32.totalorder %s21, 3
      %p56 = por %p54, %p55
      %p58 = scmp.ne.s32.totalorder %s41, %s57
      %p59 = scmp.eq.s32.totalorder %s21, 0
      %p60 = por %p58, %p59
      %s61 = ssub.s32 %s22, %s34
      %p62 = scmp.eq.s32.totalorder %s61, 0
      %s64 = sadd.s32 %s63, 1
      %s65 = scalar_select %p62, %s63, %s64
      %p68 = pneg %p62
      %p69 = scmp.eq.s32.totalorder %s15, 3
      %p70 = por %p68, %p69
      %p71 = scmp.ne.s32.totalorder %s63, %s66
      %p72 = scmp.eq.s32.totalorder %s15, 0
      %p73 = por %p71, %p72
      %p74 = scmp.ne.s32.totalorder %s63, %s66
      %p75 = scmp.eq.s32.totalorder %s20, 3
      %p76 = por %p74, %p75
      %p77 = scmp.ne.s32.totalorder %s66, %s67
      %p78 = scmp.eq.s32.totalorder %s20, 0
      %p79 = por %p77, %p78
      %p80 = scmp.ne.s32.totalorder %s66, %s67
      %p81 = scmp.eq.s32.totalorder %s21, 3
      %p82 = por %p80, %p81
      %p84 = scmp.ne.s32.totalorder %s67, %s83
      %p85 = scmp.eq.s32.totalorder %s21, 0
      %p86 = por %p84, %p85
      %s87 = ssub.s32 %s22, %s34
      %s88 = ssub.s32 %s23, %s30
      %s89 = sor.u32 %s87, %s88
      %p90 = scmp.eq.s32.totalorder %s89, 0
      %s92 = sadd.s32 %s91, 1
      %s93 = scalar_select %p90, %s91, %s92
      %p96 = pneg %p90
      %p97 = scmp.eq.s32.totalorder %s15, 3
      %p98 = por %p96, %p97
      %p99 = scmp.ne.s32.totalorder %s91, %s94
      %p100 = scmp.eq.s32.totalorder %s15, 0
      %p101 = por %p99, %p100
      %p102 = scmp.ne.s32.totalorder %s91, %s94
      %p103 = scmp.eq.s32.totalorder %s20, 3
      %p104 = por %p102, %p103
      %p105 = scmp.ne.s32.totalorder %s94, %s95
      %p106 = scmp.eq.s32.totalorder %s20, 0
      %p107 = por %p105, %p106
      %p108 = scmp.ne.s32.totalorder %s94, %s95
      %p109 = scmp.eq.s32.totalorder %s21, 3
      %p110 = por %p108, %p109
      %p112 = scmp.ne.s32.totalorder %s95, %s111
      %p113 = scmp.eq.s32.totalorder %s21, 0
      %p114 = por %p112, %p113
      %p115 = scmp.le.s32.totalorder 1, %s15
      %p116 = scmp.lt.s32.totalorder %s15, 5
      %p117 = pnand %p115, %p116
      %p118 = pneg %p117
      // Predicated region
      $region9: #{tpu_custom_call.1} parent=5 // pred_check
        _
      $region10: #{tpu_custom_call.1} parent=5 // pred_check_branch
        %120 = sbr.rel (%p117) target = $region12
      $region11: #{tpu_custom_call.1} parent=5 // pred_region
        %s121 = ssub.s32 %s15, 1
        // Predicated region
        $region13: #{tpu_custom_call.1} parent=11 // pred_check
          %p122 = pneg %p79
        $region14: #{tpu_custom_call.1} parent=11 // pred_check_branch
          %124 = sbr.rel (%p122) target = $region16
        $region15: #{tpu_custom_call.1} parent=11 // pred_region
          %126 = vsyncadd [#allocation7], 0
          %s127 = smul.addr %s24, 8
          %s128 = scalar_lea.hbm %s1, %s127
          %s130 = sshll.u32 %s128, 4
          %s131 = int_to_ptr.hbm [resolvable:$true] %s130
          %s132 = sshll.u32 [#allocation6], 4
          %s133 = int_to_ptr.vmem [resolvable:$true] %s132
          %135 = dma.hbm_to_vmem [thread:$0]  %s131, 128, %s133, [#allocation7]
        $region16: #{tpu_custom_call.1} parent=11 // pred_fallthru
          _
      $region12: #{tpu_custom_call.1} parent=5 // pred_fallthru
        _
      %p136 = scmp.lt.s32.totalorder %s15, 4
      // Predicated region
      $region17: #{tpu_custom_call.1} parent=5 // pred_check
        %p137 = pneg %p136
      $region18: #{tpu_custom_call.1} parent=5 // pred_check_branch
        %139 = sbr.rel (%p137) target = $region20
      $region19: #{tpu_custom_call.1} parent=5 // pred_region
        // Predicated region
        $region21: #{tpu_custom_call.1} parent=19 // pred_check
          %p140 = pneg %p47
        $region22: #{tpu_custom_call.1} parent=19 // pred_check_branch
          %142 = sbr.rel (%p140) target = $region24
        $region23: #{tpu_custom_call.1} parent=19 // pred_region
          %s143 = sand.u32 %s37, 1
          %s144 = scalar_lea.sflag [#allocation4], %s143
          %s145 = sand.u32 %s37, 1
          %s146 = smul.addr %s145, 16
          %s147 = scalar_lea.vmem [#allocation3], %s146
          %s148 = smul.u32 2, %s23
          %150 = vsyncadd %s144, 0
          %s151 = smul.addr %s148, 8
          %s152 = scalar_lea.hbm %s0, %s151
          %s154 = sshll.u32 %s152, 4
          %s155 = int_to_ptr.hbm [resolvable:$true] %s154
          %s156 = sshll.u32 %s147, 4
          %s157 = int_to_ptr.vmem [resolvable:$true] %s156
          %159 = dma.hbm_to_vmem [thread:$0]  %s155, 256, %s157, %s144
        $region24: #{tpu_custom_call.1} parent=19 // pred_fallthru
          _
      $region20: #{tpu_custom_call.1} parent=5 // pred_fallthru
        _
      %p160 = scmp.le.s32.totalorder 1, %s15
      %p161 = scmp.lt.s32.totalorder %s15, 5
      %p162 = pnand %p160, %p161
      %p163 = pneg %p162
      // Predicated region
      $region25: #{tpu_custom_call.1} parent=5 // pred_check
        _
      $region26: #{tpu_custom_call.1} parent=5 // pred_check_branch
        %165 = sbr.rel (%p162) target = $region28
      $region27: #{tpu_custom_call.1} parent=5 // pred_region
        %s166 = ssub.s32 %s15, 1
        %s167 = sand.u32 %s40, 1
        %s168 = scalar_lea.sflag [#allocation4], %s167
        %s169 = sand.u32 %s40, 1
        %s170 = smul.addr %s169, 16
        %s171 = scalar_lea.vmem [#allocation3], %s170
        // Predicated region
        $region29: #{tpu_custom_call.1} parent=27 // pred_check
          %p172 = pneg %p53
        $region30: #{tpu_custom_call.1} parent=27 // pred_check_branch
          %174 = sbr.rel (%p172) target = $region32
        $region31: #{tpu_custom_call.1} parent=27 // pred_region
          %176 = dma.done %s168, 256
        $region32: #{tpu_custom_call.1} parent=27 // pred_fallthru
          _
        // Predicated region
        $region33: #{tpu_custom_call.1} parent=27 // pred_check
          %p177 = pneg %p79
        $region34: #{tpu_custom_call.1} parent=27 // pred_check_branch
          %179 = sbr.rel (%p177) target = $region36
        $region35: #{tpu_custom_call.1} parent=27 // pred_region
          %181 = dma.done [#allocation7], 128
        $region36: #{tpu_custom_call.1} parent=27 // pred_fallthru
          _
        %s182 = sand.u32 %s40, 1
        %s183 = scalar_lea.sflag [#allocation4], %s182
        %s184 = sand.u32 %s40, 1
        %s185 = smul.addr %s184, 16
        %s186 = scalar_lea.vmem [#allocation3], %s185
        %p187 = pneg %p53
        %p188 = pneg %p50
        %p189 = pneg %p79
        %p190 = pneg %p76
        %p191 = pneg %p107
        %p192 = pneg %p104
        %s193 = sand.u32 %s94, 1
        %s194 = scalar_lea.sflag [#allocation5], %s193
        %s195 = sand.u32 %s94, 1
        %s196 = smul.addr %s195, 16
        %s197 = scalar_lea.vmem [#allocation8], %s196
        %s198 = smul.u32 2, %s25
        %s199 = smul.u32 2, %s25
        %v200 = vld [vmem:[%s171] sm:$0xff]
        %v201 = vld [vmem:[%s171 + $0x8] sm:$0xff]
        %vm202 = vcmp.ge.f32.partialorder %v200, 0.0
        %vm203 = vcmp.ge.f32.partialorder %v201, 0.0
        %vm204 = vcmp.lt.f32.partialorder %v200, 0.125
        %vm205 = vcmp.lt.f32.partialorder %v201, 0.125
        %vm206 = vmand %vm202, %vm204
        %vm207 = vmand %vm203, %vm205
        %v208 = vsel %vm206, 1, 0
        %v209 = vsel %vm207, 1, 0
        %v210 = vcvt.s32.f32 %v208
        %v211 = vcvt.s32.f32 %v209
        %vm212 = vcmp.ge.f32.partialorder %v200, 0.125
        %vm213 = vcmp.ge.f32.partialorder %v201, 0.125
        %vm214 = vcmp.lt.f32.partialorder %v200, 0.25
        %vm215 = vcmp.lt.f32.partialorder %v201, 0.25
        %vm216 = vmand %vm212, %vm214
        %vm217 = vmand %vm213, %vm215
        %v218 = vsel %vm216, 1, 0
        %v219 = vsel %vm217, 1, 0
        %v220 = vcvt.s32.f32 %v218
        %v221 = vcvt.s32.f32 %v219
        %vm222 = vcmp.ge.f32.partialorder %v200, 0.25
        %vm223 = vcmp.ge.f32.partialorder %v201, 0.25
        %vm224 = vcmp.lt.f32.partialorder %v200, 0.375
        %vm225 = vcmp.lt.f32.partialorder %v201, 0.375
        %vm226 = vmand %vm222, %vm224
        %vm227 = vmand %vm223, %vm225
        %v228 = vsel %vm226, 1, 0
        %v229 = vsel %vm227, 1, 0
        %v230 = vcvt.s32.f32 %v228
        %v231 = vcvt.s32.f32 %v229
        %vm232 = vcmp.ge.f32.partialorder %v200, 0.375
        %vm233 = vcmp.ge.f32.partialorder %v201, 0.375
        %vm234 = vcmp.lt.f32.partialorder %v200, 0.5
        %vm235 = vcmp.lt.f32.partialorder %v201, 0.5
        %vm236 = vmand %vm232, %vm234
        %vm237 = vmand %vm233, %vm235
        %v238 = vsel %vm236, 1, 0
        %v239 = vsel %vm237, 1, 0
        %v240 = vcvt.s32.f32 %v238
        %v241 = vcvt.s32.f32 %v239
        %vm242 = vcmp.ge.f32.partialorder %v200, 0.5
        %vm243 = vcmp.ge.f32.partialorder %v201, 0.5
        %vm244 = vcmp.lt.f32.partialorder %v200, 0.625
        %vm245 = vcmp.lt.f32.partialorder %v201, 0.625
        %vm246 = vmand %vm242, %vm244
        %vm247 = vmand %vm243, %vm245
        %v248 = vsel %vm246, 1, 0
        %v249 = vsel %vm247, 1, 0
        %v250 = vcvt.s32.f32 %v248
        %v251 = vcvt.s32.f32 %v249
        %vm252 = vcmp.ge.f32.partialorder %v200, 0.625
        %vm253 = vcmp.ge.f32.partialorder %v201, 0.625
        %vm254 = vcmp.lt.f32.partialorder %v200, 0.75
        %vm255 = vcmp.lt.f32.partialorder %v201, 0.75
        %vm256 = vmand %vm252, %vm254
        %vm257 = vmand %vm253, %vm255
        %v258 = vsel %vm256, 1, 0
        %v259 = vsel %vm257, 1, 0
        %v260 = vcvt.s32.f32 %v258
        %v261 = vcvt.s32.f32 %v259
        %vm262 = vcmp.ge.f32.partialorder %v200, 0.75
        %vm263 = vcmp.ge.f32.partialorder %v201, 0.75
        %vm264 = vcmp.lt.f32.partialorder %v200, 0.875
        %vm265 = vcmp.lt.f32.partialorder %v201, 0.875
        %vm266 = vmand %vm262, %vm264
        %vm267 = vmand %vm263, %vm265
        %v268 = vsel %vm266, 1, 0
        %v269 = vsel %vm267, 1, 0
        %v270 = vcvt.s32.f32 %v268
        %v271 = vcvt.s32.f32 %v269
        %vm272 = vcmp.ge.f32.partialorder %v200, 0.875
        %vm273 = vcmp.ge.f32.partialorder %v201, 0.875
        %vm274 = vcmp.lt.f32.partialorder %v200, 1.0
        %vm275 = vcmp.lt.f32.partialorder %v201, 1.0
        %vm276 = vmand %vm272, %vm274
        %vm277 = vmand %vm273, %vm275
        %v278 = vsel %vm276, 1, 0
        %v279 = vsel %vm277, 1, 0
        %v280 = vcvt.s32.f32 %v278
        %v281 = vcvt.s32.f32 %v279
        %v282 = vsub.f32 0.125, %v200
        %v283 = vsub.f32 0.125, %v201
        %v284 = vmul.f32 %v282, 8.0
        %v285 = vmul.f32 %v283, 8.0
        %v286 = vmul.f32 %v284, %v210
        %v287 = vmul.f32 %v285, %v211
        %v288 = vadd.f32 %v286, 0.0
        %v289 = vadd.f32 %v287, 0.0
        %v290 = vmul.f32 %v200, 8.0
        %v291 = vmul.f32 %v201, 8.0
        %v292 = vmul.f32 %v290, %v210
        %v293 = vmul.f32 %v291, %v211
        %v294 = vadd.f32 %v292, 0.0
        %v295 = vadd.f32 %v293, 0.0
        %v296 = vsub.f32 0.25, %v200
        %v297 = vsub.f32 0.25, %v201
        %v298 = vmul.f32 %v296, 8.0
        %v299 = vmul.f32 %v297, 8.0
        %v300 = vmul.f32 %v298, %v220
        %v301 = vmul.f32 %v299, %v221
        %v302 = vadd.f32 %v294, %v300
        %v303 = vadd.f32 %v295, %v301
        %v304 = vsub.f32 %v200, 0.125
        %v305 = vsub.f32 %v201, 0.125
        %v306 = vmul.f32 %v304, 8.0
        %v307 = vmul.f32 %v305, 8.0
        %v308 = vmul.f32 %v306, %v220
        %v309 = vmul.f32 %v307, %v221
        %v310 = vadd.f32 %v308, 0.0
        %v311 = vadd.f32 %v309, 0.0
        %v312 = vsub.f32 0.375, %v200
        %v313 = vsub.f32 0.375, %v201
        %v314 = vmul.f32 %v312, 8.0
        %v315 = vmul.f32 %v313, 8.0
        %v316 = vmul.f32 %v314, %v230
        %v317 = vmul.f32 %v315, %v231
        %v318 = vadd.f32 %v310, %v316
        %v319 = vadd.f32 %v311, %v317
        %v320 = vsub.f32 %v200, 0.25
        %v321 = vsub.f32 %v201, 0.25
        %v322 = vmul.f32 %v320, 8.0
        %v323 = vmul.f32 %v321, 8.0
        %v324 = vmul.f32 %v322, %v230
        %v325 = vmul.f32 %v323, %v231
        %v326 = vadd.f32 %v324, 0.0
        %v327 = vadd.f32 %v325, 0.0
        %v328 = vsub.f32 0.5, %v200
        %v329 = vsub.f32 0.5, %v201
        %v330 = vmul.f32 %v328, 8.0
        %v331 = vmul.f32 %v329, 8.0
        %v332 = vmul.f32 %v330, %v240
        %v333 = vmul.f32 %v331, %v241
        %v334 = vadd.f32 %v326, %v332
        %v335 = vadd.f32 %v327, %v333
        %v336 = vsub.f32 %v200, 0.375
        %v337 = vsub.f32 %v201, 0.375
        %v338 = vmul.f32 %v336, 8.0
        %v339 = vmul.f32 %v337, 8.0
        %v340 = vmul.f32 %v338, %v240
        %v341 = vmul.f32 %v339, %v241
        %v342 = vadd.f32 %v340, 0.0
        %v343 = vadd.f32 %v341, 0.0
        %v344 = vsub.f32 0.625, %v200
        %v345 = vsub.f32 0.625, %v201
        %v346 = vmul.f32 %v344, 8.0
        %v347 = vmul.f32 %v345, 8.0
        %v348 = vmul.f32 %v346, %v250
        %v349 = vmul.f32 %v347, %v251
        %v350 = vadd.f32 %v342, %v348
        %v351 = vadd.f32 %v343, %v349
        %v352 = vsub.f32 %v200, 0.5
        %v353 = vsub.f32 %v201, 0.5
        %v354 = vmul.f32 %v352, 8.0
        %v355 = vmul.f32 %v353, 8.0
        %v356 = vmul.f32 %v354, %v250
        %v357 = vmul.f32 %v355, %v251
        %v358 = vadd.f32 %v356, 0.0
        %v359 = vadd.f32 %v357, 0.0
        %v360 = vsub.f32 0.75, %v200
        %v361 = vsub.f32 0.75, %v201
        %v362 = vmul.f32 %v360, 8.0
        %v363 = vmul.f32 %v361, 8.0
        %v364 = vmul.f32 %v362, %v260
        %v365 = vmul.f32 %v363, %v261
        %v366 = vadd.f32 %v358, %v364
        %v367 = vadd.f32 %v359, %v365
        %v368 = vsub.f32 %v200, 0.625
        %v369 = vsub.f32 %v201, 0.625
        %v370 = vmul.f32 %v368, 8.0
        %v371 = vmul.f32 %v369, 8.0
        %v372 = vmul.f32 %v370, %v260
        %v373 = vmul.f32 %v371, %v261
        %v374 = vadd.f32 %v372, 0.0
        %v375 = vadd.f32 %v373, 0.0
        %v376 = vsub.f32 0.875, %v200
        %v377 = vsub.f32 0.875, %v201
        %v378 = vmul.f32 %v376, 8.0
        %v379 = vmul.f32 %v377, 8.0
        %v380 = vmul.f32 %v378, %v270
        %v381 = vmul.f32 %v379, %v271
        %v382 = vadd.f32 %v374, %v380
        %v383 = vadd.f32 %v375, %v381
        %v384 = vsub.f32 %v200, 0.75
        %v385 = vsub.f32 %v201, 0.75
        %v386 = vmul.f32 %v384, 8.0
        %v387 = vmul.f32 %v385, 8.0
        %v388 = vmul.f32 %v386, %v270
        %v389 = vmul.f32 %v387, %v271
        %v390 = vadd.f32 %v388, 0.0
        %v391 = vadd.f32 %v389, 0.0
        %v392 = vsub.f32 1.0, %v200
        %v393 = vsub.f32 1.0, %v201
        %v394 = vmul.f32 %v392, 8.0
        %v395 = vmul.f32 %v393, 8.0
        %v396 = vmul.f32 %v394, %v280
        %v397 = vmul.f32 %v395, %v281
        %v398 = vadd.f32 %v390, %v396
        %v399 = vadd.f32 %v391, %v397
        %v400 = vsub.f32 %v200, 0.875
        %v401 = vsub.f32 %v201, 0.875
        %v402 = vmul.f32 %v400, 8.0
        %v403 = vmul.f32 %v401, 8.0
        %v404 = vmul.f32 %v402, %v280
        %v405 = vmul.f32 %v403, %v281
        %v406 = vadd.f32 %v404, 0.0
        %v407 = vadd.f32 %v405, 0.0
        %v408 = vmul.f32 %v284, %v288
        %v409 = vmul.f32 %v285, %v289
        %v410 = vadd.f32 %v408, 0.0
        %v411 = vadd.f32 %v409, 0.0
        %v412 = vmul.f32 %v290, %v288
        %v413 = vmul.f32 %v291, %v289
        %v414 = vadd.f32 %v412, 0.0
        %v415 = vadd.f32 %v413, 0.0
        %v416 = vmul.f32 %v296, 4.0
        %v417 = vmul.f32 %v297, 4.0
        %v418 = vmul.f32 %v416, %v302
        %v419 = vmul.f32 %v417, %v303
        %v420 = vadd.f32 %v414, %v418
        %v421 = vadd.f32 %v415, %v419
        %v422 = vmul.f32 %v200, 4.0
        %v423 = vmul.f32 %v201, 4.0
        %v424 = vmul.f32 %v422, %v302
        %v425 = vmul.f32 %v423, %v303
        %v426 = vadd.f32 %v424, 0.0
        %v427 = vadd.f32 %v425, 0.0
        %v428 = vmul.f32 %v312, 4.0
        %v429 = vmul.f32 %v313, 4.0
        %v430 = vmul.f32 %v428, %v318
        %v431 = vmul.f32 %v429, %v319
        %v432 = vadd.f32 %v426, %v430
        %v433 = vadd.f32 %v427, %v431
        %v434 = vmul.f32 %v304, 4.0
        %v435 = vmul.f32 %v305, 4.0
        %v436 = vmul.f32 %v434, %v318
        %v437 = vmul.f32 %v435, %v319
        %v438 = vadd.f32 %v436, 0.0
        %v439 = vadd.f32 %v437, 0.0
        %v440 = vmul.f32 %v328, 4.0
        %v441 = vmul.f32 %v329, 4.0
        %v442 = vmul.f32 %v440, %v334
        %v443 = vmul.f32 %v441, %v335
        %v444 = vadd.f32 %v438, %v442
        %v445 = vadd.f32 %v439, %v443
        %v446 = vmul.f32 %v320, 4.0
        %v447 = vmul.f32 %v321, 4.0
        %v448 = vmul.f32 %v446, %v334
        %v449 = vmul.f32 %v447, %v335
        %v450 = vadd.f32 %v448, 0.0
        %v451 = vadd.f32 %v449, 0.0
        %v452 = vmul.f32 %v344, 4.0
        %v453 = vmul.f32 %v345, 4.0
        %v454 = vmul.f32 %v452, %v350
        %v455 = vmul.f32 %v453, %v351
        %v456 = vadd.f32 %v450, %v454
        %v457 = vadd.f32 %v451, %v455
        %v458 = vmul.f32 %v336, 4.0
        %v459 = vmul.f32 %v337, 4.0
        %v460 = vmul.f32 %v458, %v350
        %v461 = vmul.f32 %v459, %v351
        %v462 = vadd.f32 %v460, 0.0
        %v463 = vadd.f32 %v461, 0.0
        %v464 = vmul.f32 %v360, 4.0
        %v465 = vmul.f32 %v361, 4.0
        %v466 = vmul.f32 %v464, %v366
        %v467 = vmul.f32 %v465, %v367
        %v468 = vadd.f32 %v462, %v466
        %v469 = vadd.f32 %v463, %v467
        %v470 = vmul.f32 %v352, 4.0
        %v471 = vmul.f32 %v353, 4.0
        %v472 = vmul.f32 %v470, %v366
        %v473 = vmul.f32 %v471, %v367
        %v474 = vadd.f32 %v472, 0.0
        %v475 = vadd.f32 %v473, 0.0
        %v476 = vmul.f32 %v376, 4.0
        %v477 = vmul.f32 %v377, 4.0
        %v478 = vmul.f32 %v476, %v382
        %v479 = vmul.f32 %v477, %v383
        %v480 = vadd.f32 %v474, %v478
        %v481 = vadd.f32 %v475, %v479
        %v482 = vmul.f32 %v368, 4.0
        %v483 = vmul.f32 %v369, 4.0
        %v484 = vmul.f32 %v482, %v382
        %v485 = vmul.f32 %v483, %v383
        %v486 = vadd.f32 %v484, 0.0
        %v487 = vadd.f32 %v485, 0.0
        %v488 = vmul.f32 %v392, 4.0
        %v489 = vmul.f32 %v393, 4.0
        %v490 = vmul.f32 %v488, %v398
        %v491 = vmul.f32 %v489, %v399
        %v492 = vadd.f32 %v486, %v490
        %v493 = vadd.f32 %v487, %v491
        %v494 = vmul.f32 %v384, 4.0
        %v495 = vmul.f32 %v385, 4.0
        %v496 = vmul.f32 %v494, %v398
        %v497 = vmul.f32 %v495, %v399
        %v498 = vadd.f32 %v496, 0.0
        %v499 = vadd.f32 %v497, 0.0
        %v500 = vmul.f32 %v394, %v406
        %v501 = vmul.f32 %v395, %v407
        %v502 = vadd.f32 %v498, %v500
        %v503 = vadd.f32 %v499, %v501
        %v504 = vmul.f32 %v402, %v406
        %v505 = vmul.f32 %v403, %v407
        %v506 = vadd.f32 %v504, 0.0
        %v507 = vadd.f32 %v505, 0.0
        %v508 = vmul.f32 %v284, %v410
        %v509 = vmul.f32 %v285, %v411
        %v510 = vadd.f32 %v508, 0.0
        %v511 = vadd.f32 %v509, 0.0
        %512 = vst [vmem:[#allocation2] sm:$0xff] %v510
        %513 = vst [vmem:[#allocation2 + $0x8] sm:$0xff] %v511
        %v514 = vmul.f32 %v290, %v410
        %v515 = vmul.f32 %v291, %v411
        %v516 = vadd.f32 %v514, 0.0
        %v517 = vadd.f32 %v515, 0.0
        %v518 = vmul.f32 %v416, %v420
        %v519 = vmul.f32 %v417, %v421
        %v520 = vadd.f32 %v516, %v518
        %v521 = vadd.f32 %v517, %v519
        %522 = vst [vmem:[#allocation2 + $0x10] sm:$0xff] %v520
        %523 = vst [vmem:[#allocation2 + $0x18] sm:$0xff] %v521
        %v524 = vmul.f32 %v422, %v420
        %v525 = vmul.f32 %v423, %v421
        %v526 = vadd.f32 %v524, 0.0
        %v527 = vadd.f32 %v525, 0.0
        %v528 = vmul.f32 %v312, 2.6666667
        %v529 = vmul.f32 %v313, 2.6666667
        %v530 = vmul.f32 %v528, %v432
        %v531 = vmul.f32 %v529, %v433
        %v532 = vadd.f32 %v526, %v530
        %v533 = vadd.f32 %v527, %v531
        %534 = vst [vmem:[#allocation2 + $0x20] sm:$0xff] %v532
        %535 = vst [vmem:[#allocation2 + $0x28] sm:$0xff] %v533
        %v536 = vmul.f32 %v200, 2.6666667
        %v537 = vmul.f32 %v201, 2.6666667
        %v538 = vmul.f32 %v536, %v432
        %v539 = vmul.f32 %v537, %v433
        %v540 = vadd.f32 %v538, 0.0
        %v541 = vadd.f32 %v539, 0.0
        %v542 = vmul.f32 %v328, 2.6666667
        %v543 = vmul.f32 %v329, 2.6666667
        %v544 = vmul.f32 %v542, %v444
        %v545 = vmul.f32 %v543, %v445
        %v546 = vadd.f32 %v540, %v544
        %v547 = vadd.f32 %v541, %v545
        %548 = vst [vmem:[#allocation2 + $0x30] sm:$0xff] %v546
        %549 = vst [vmem:[#allocation2 + $0x38] sm:$0xff] %v547
        %v550 = vmul.f32 %v304, 2.6666667
        %v551 = vmul.f32 %v305, 2.6666667
        %v552 = vmul.f32 %v550, %v444
        %v553 = vmul.f32 %v551, %v445
        %v554 = vadd.f32 %v552, 0.0
        %v555 = vadd.f32 %v553, 0.0
        %v556 = vmul.f32 %v344, 2.6666667
        %v557 = vmul.f32 %v345, 2.6666667
        %v558 = vmul.f32 %v556, %v456
        %v559 = vmul.f32 %v557, %v457
        %v560 = vadd.f32 %v554, %v558
        %v561 = vadd.f32 %v555, %v559
        %562 = vst [vmem:[#allocation2 + $0x40] sm:$0xff] %v560
        %563 = vst [vmem:[#allocation2 + $0x48] sm:$0xff] %v561
        %v564 = vmul.f32 %v320, 2.6666667
        %v565 = vmul.f32 %v321, 2.6666667
        %v566 = vmul.f32 %v564, %v456
        %v567 = vmul.f32 %v565, %v457
        %v568 = vadd.f32 %v566, 0.0
        %v569 = vadd.f32 %v567, 0.0
        %v570 = vmul.f32 %v360, 2.6666667
        %v571 = vmul.f32 %v361, 2.6666667
        %v572 = vmul.f32 %v570, %v468
        %v573 = vmul.f32 %v571, %v469
        %v574 = vadd.f32 %v568, %v572
        %v575 = vadd.f32 %v569, %v573
        %576 = vst [vmem:[#allocation2 + $0x50] sm:$0xff] %v574
        %577 = vst [vmem:[#allocation2 + $0x58] sm:$0xff] %v575
        %v578 = vmul.f32 %v336, 2.6666667
        %v579 = vmul.f32 %v337, 2.6666667
        %v580 = vmul.f32 %v578, %v468
        %v581 = vmul.f32 %v579, %v469
        %v582 = vadd.f32 %v580, 0.0
        %v583 = vadd.f32 %v581, 0.0
        %v584 = vmul.f32 %v376, 2.6666667
        %v585 = vmul.f32 %v377, 2.6666667
        %v586 = vmul.f32 %v584, %v480
        %v587 = vmul.f32 %v585, %v481
        %v588 = vadd.f32 %v582, %v586
        %v589 = vadd.f32 %v583, %v587
        %590 = vst [vmem:[#allocation2 + $0x60] sm:$0xff] %v588
        %591 = vst [vmem:[#allocation2 + $0x68] sm:$0xff] %v589
        %v592 = vmul.f32 %v352, 2.6666667
        %v593 = vmul.f32 %v353, 2.6666667
        %v594 = vmul.f32 %v592, %v480
        %v595 = vmul.f32 %v593, %v481
        %v596 = vadd.f32 %v594, 0.0
        %v597 = vadd.f32 %v595, 0.0
        %v598 = vmul.f32 %v392, 2.6666667
        %v599 = vmul.f32 %v393, 2.6666667
        %v600 = vmul.f32 %v598, %v492
        %v601 = vmul.f32 %v599, %v493
        %v602 = vadd.f32 %v596, %v600
        %v603 = vadd.f32 %v597, %v601
        %604 = vst [vmem:[#allocation2 + $0x70] sm:$0xff] %v602
        %605 = vst [vmem:[#allocation2 + $0x78] sm:$0xff] %v603
        %v606 = vmul.f32 %v368, 2.6666667
        %v607 = vmul.f32 %v369, 2.6666667
        %v608 = vmul.f32 %v606, %v492
        %v609 = vmul.f32 %v607, %v493
        %v610 = vadd.f32 %v608, 0.0
        %v611 = vadd.f32 %v609, 0.0
        %v612 = vmul.f32 %v488, %v502
        %v613 = vmul.f32 %v489, %v503
        %v614 = vadd.f32 %v610, %v612
        %v615 = vadd.f32 %v611, %v613
        %616 = vst [vmem:[#allocation2 + $0x80] sm:$0xff] %v614
        %617 = vst [vmem:[#allocation2 + $0x88] sm:$0xff] %v615
        %v618 = vmul.f32 %v494, %v502
        %v619 = vmul.f32 %v495, %v503
        %v620 = vadd.f32 %v618, 0.0
        %v621 = vadd.f32 %v619, 0.0
        %v622 = vmul.f32 %v394, %v506
        %v623 = vmul.f32 %v395, %v507
        %v624 = vadd.f32 %v620, %v622
        %v625 = vadd.f32 %v621, %v623
        %626 = vst [vmem:[#allocation2 + $0x90] sm:$0xff] %v624
        %627 = vst [vmem:[#allocation2 + $0x98] sm:$0xff] %v625
        %v628 = vmul.f32 %v402, %v506
        %v629 = vmul.f32 %v403, %v507
        %v630 = vadd.f32 %v628, 0.0
        %v631 = vadd.f32 %v629, 0.0
        %632 = vst [vmem:[#allocation2 + $0xa0] sm:$0xff] %v630
        %633 = vst [vmem:[#allocation2 + $0xa8] sm:$0xff] %v631
        %v634 = vxor.u32 %v200, 2147483648
        %v635 = vxor.u32 %v201, 2147483648
        %v636 = vmul.f32 %v634, 1.442695
        %v637 = vpow.pop %v636
        %v638 = vmul.f32 %v635, 1.442695
        %v639 = vpow.pop %v638
        %v640 = vadd.f32 %v637, 1.0
        %v641 = vadd.f32 %v639, 1.0
        %v642 = vrcp.pop %v640
        %v643 = vmul.f32 %v640, %v642
        %v644 = vsub.f32 1.0, %v643
        %v645 = vmul.f32 %v642, %v644
        %v646 = vadd.f32 %v642, %v645
        %vm647 = vweird.f32 %v640
        %vm648 = vweird.f32 %v642
        %vm649 = vmor %vm647, %vm648
        %v650 = vsel %vm649, %v642, %v646
        %v651 = vand.u32 2147483647, %v640
        %vm652 = vcmp.eq.f32.partialorder %v651, 8.507059e+37
        %v653 = vand.u32 %v640, 2147483648
        %v654 = vor.u32 1.1754944e-38, %v653
        %v655 = vsel %vm652, %v654, %v650
        %v656 = vmul.f32 1.0, %v655
        %v657 = vrcp.pop %v641
        %v658 = vmul.f32 %v641, %v657
        %v659 = vsub.f32 1.0, %v658
        %v660 = vmul.f32 %v657, %v659
        %v661 = vadd.f32 %v657, %v660
        %vm662 = vweird.f32 %v641
        %vm663 = vweird.f32 %v657
        %vm664 = vmor %vm662, %vm663
        %v665 = vsel %vm664, %v657, %v661
        %v666 = vand.u32 2147483647, %v641
        %vm667 = vcmp.eq.f32.partialorder %v666, 8.507059e+37
        %v668 = vand.u32 %v641, 2147483648
        %v669 = vor.u32 1.1754944e-38, %v668
        %v670 = vsel %vm667, %v669, %v665
        %v671 = vmul.f32 1.0, %v670
        %v672 = vmul.f32 %v200, %v656
        %v673 = vmul.f32 %v201, %v671
        %674 = vst [vmem:[#allocation2 + $0xb0] sm:$0xff] %v672
        %675 = vst [vmem:[#allocation2 + $0xb8] sm:$0xff] %v673
        %v676 = vld [vmem:[#allocation2] sm:$0xff]
        %v677 = vld [vmem:[#allocation2 + $0x8] sm:$0xff]
        %v678 = vld [vmem:[#allocation2 + $0x10] sm:$0xff]
        %v679 = vld [vmem:[#allocation2 + $0x18] sm:$0xff]
        %v680 = vld [vmem:[#allocation2 + $0x20] sm:$0xff]
        %v681 = vld [vmem:[#allocation2 + $0x28] sm:$0xff]
        %v682 = vld [vmem:[#allocation2 + $0x30] sm:$0xff]
        %v683 = vld [vmem:[#allocation2 + $0x38] sm:$0xff]
        %v684 = vld [vmem:[#allocation2 + $0x40] sm:$0xff]
        %v685 = vld [vmem:[#allocation2 + $0x48] sm:$0xff]
        %v686 = vld [vmem:[#allocation2 + $0x50] sm:$0xff]
        %v687 = vld [vmem:[#allocation2 + $0x58] sm:$0xff]
        %v688 = vld [vmem:[#allocation2 + $0x60] sm:$0xff]
        %v689 = vld [vmem:[#allocation2 + $0x68] sm:$0xff]
        %v690 = vld [vmem:[#allocation2 + $0x70] sm:$0xff]
        %v691 = vld [vmem:[#allocation2 + $0x78] sm:$0xff]
        %v692 = vld [vmem:[#allocation2 + $0x80] sm:$0xff]
        %v693 = vld [vmem:[#allocation2 + $0x88] sm:$0xff]
        %v694 = vld [vmem:[#allocation2 + $0x90] sm:$0xff]
        %v695 = vld [vmem:[#allocation2 + $0x98] sm:$0xff]
        %v696 = vld [vmem:[#allocation2 + $0xa0] sm:$0xff]
        %v697 = vld [vmem:[#allocation2 + $0xa8] sm:$0xff]
        %v698 = vld [vmem:[#allocation2 + $0xb0] sm:$0xff]
        %v699 = vld [vmem:[#allocation2 + $0xb8] sm:$0xff]
        %v700 = vld [vmem:[#allocation6] sm:$0xff]
        %vm701 = vcmask 785408
        %v703 = vsel %vm701, %v700, 0
        %705 = vmatpush.msra.mxu0 0.0
        %706 = vmatpush.msra.mxu0 0.0
        %707 = vmatpush.msra.mxu0 0.0
        %708 = vmatpush.msra.mxu0 0.0
        %709 = vmatpush.msra.mxu0 %v698
        %710 = vmatpush.msra.mxu0 %v696
        %711 = vmatpush.msra.mxu0 %v694
        %712 = vmatpush.msra.mxu0 %v692
        %713 = vmatpush.msra.mxu0 %v690
        %714 = vmatpush.msra.mxu0 %v688
        %715 = vmatpush.msra.mxu0 %v686
        %716 = vmatpush.msra.mxu0 %v684
        %717 = vmatpush.msra.mxu0 %v682
        %718 = vmatpush.msra.mxu0 %v680
        %719 = vmatpush.msra.mxu0 %v678
        %720 = vmatpush.msra.mxu0 %v676
        %721 = vmatmul.f32.gmra.mxu0 %v703
        %v722 = vpop.f32.mrf.mxu0
        %v723 = vadd.f32 0.0, %v722
        %724 = vdwg.mxu0
        %725 = vmatpush.msra.mxu0 0.0
        %726 = vmatpush.msra.mxu0 0.0
        %727 = vmatpush.msra.mxu0 0.0
        %728 = vmatpush.msra.mxu0 0.0
        %729 = vmatpush.msra.mxu0 %v699
        %730 = vmatpush.msra.mxu0 %v697
        %731 = vmatpush.msra.mxu0 %v695
        %732 = vmatpush.msra.mxu0 %v693
        %733 = vmatpush.msra.mxu0 %v691
        %734 = vmatpush.msra.mxu0 %v689
        %735 = vmatpush.msra.mxu0 %v687
        %736 = vmatpush.msra.mxu0 %v685
        %737 = vmatpush.msra.mxu0 %v683
        %738 = vmatpush.msra.mxu0 %v681
        %739 = vmatpush.msra.mxu0 %v679
        %740 = vmatpush.msra.mxu0 %v677
        %741 = vmatmul.f32.gmra.mxu0 %v703
        %v742 = vpop.f32.mrf.mxu0
        %v743 = vadd.f32 0.0, %v742
        %744 = vdwg.mxu0
        %745 = vst [vmem:[%s197] sm:$0xff] %v723
        %746 = vst [vmem:[%s197 + $0x8] sm:$0xff] %v743
        %s747 = sand.u32 %s94, 1
        %s748 = scalar_lea.sflag [#allocation5], %s747
        %s749 = sand.u32 %s94, 1
        %s750 = smul.addr %s749, 16
        %s751 = scalar_lea.vmem [#allocation8], %s750
        // Predicated region
        $region37: #{tpu_custom_call.1} parent=27 // pred_check
          %p752 = pneg %p104
        $region38: #{tpu_custom_call.1} parent=27 // pred_check_branch
          %754 = sbr.rel (%p752) target = $region40
        $region39: #{tpu_custom_call.1} parent=27 // pred_region
          %s755 = smul.u32 2, %s25
          %757 = vsyncadd %s748, 0
          %s758 = smul.addr %s24, 8
          %s759 = sadd.s32 %s755, %s758
          %s760 = smul.addr %s759, 8
          %s761 = scalar_lea.hbm %s2, %s760
          %s763 = sshll.u32 %s751, 4
          %s764 = int_to_ptr.vmem [resolvable:$true] %s763
          %s765 = sshll.u32 %s761, 4
          %s766 = int_to_ptr.hbm [resolvable:$true] %s765
          %768 = dma.vmem_to_hbm [thread:$0]  %s764, 256, %s766, %s748
        $region40: #{tpu_custom_call.1} parent=27 // pred_fallthru
          _
      $region28: #{tpu_custom_call.1} parent=5 // pred_fallthru
        _
      %p769 = scmp.le.s32.totalorder 2, %s15
      // Predicated region
      $region41: #{tpu_custom_call.1} parent=5 // pred_check
        %p770 = pneg %p769
      $region42: #{tpu_custom_call.1} parent=5 // pred_check_branch
        %772 = sbr.rel (%p770) target = $region44
      $region43: #{tpu_custom_call.1} parent=5 // pred_region
        %s773 = ssub.s32 %s15, 2
        // Predicated region
        $region45: #{tpu_custom_call.1} parent=43 // pred_check
          %p774 = pneg %p110
        $region46: #{tpu_custom_call.1} parent=43 // pred_check_branch
          %776 = sbr.rel (%p774) target = $region48
        $region47: #{tpu_custom_call.1} parent=43 // pred_region
          %s777 = sand.u32 %s95, 1
          %s778 = scalar_lea.sflag [#allocation5], %s777
          %s779 = sand.u32 %s95, 1
          %s780 = smul.addr %s779, 16
          %s781 = scalar_lea.vmem [#allocation8], %s780
          %783 = dma.done %s778, 256
        $region48: #{tpu_custom_call.1} parent=43 // pred_fallthru
          _
      $region44: #{tpu_custom_call.1} parent=5 // pred_fallthru
        _
    $region6: #{tpu_custom_call.1} parent=1 // loop_footer
      %s19 = sadd.s32 1, %s15
    $region7: #{tpu_custom_call.1} parent=1 // loop_footer_branch
      %14 = sbr.rel target = $region3
    $region8: #{tpu_custom_call.1} parent=1 // loop_exit
      _
    %784 = vsyncpa [#allocation4], 1
    %s785 = scalar_lea.sflag [#allocation4], 1
    %786 = vsyncpa %s785, 1
    %787 = vsyncpa [#allocation7], 1
    %788 = vsyncpa [#allocation5], 1
    %s789 = scalar_lea.sflag [#allocation5], 1
    %790 = vsyncpa %s789, 1

</llo_original>
